<compile_context>
chip_gen: v6e
topology: v6e:2x2x1
jax: 0.10.0
libtpu: 0.0.40
codegen_flags: <defaults>
</compile_context>

<pallas_src>
import math
from functools import partial

import jax
import jax.numpy as jnp
from jax.experimental import pallas as pl
from jax.experimental.pallas import tpu as pltpu


# ---------------------------------------------------------------------------
# Pallas kernel: fused matmul (both MFM halves) + bias + max
# ---------------------------------------------------------------------------
def _mfm_matmul_kernel(x_ref, w_ref, b_ref, o_ref, acc_ref):
    k = pl.program_id(1)

    @pl.when(k == 0)
    def _init():
        acc_ref[...] = jnp.zeros_like(acc_ref)

    # bf16 x bf16 -> f32 accumulate on the MXU; both halves in one pass.
    acc_ref[...] += jnp.dot(x_ref[...], w_ref[...],
                            preferred_element_type=jnp.float32)

    @pl.when(k == pl.num_programs(1) - 1)
    def _finalize():
        y = acc_ref[...] + b_ref[...]
        c = o_ref.shape[-1]                      # Cout_pad (multiple of 128)
        o_ref[...] = jnp.maximum(y[:, :c], y[:, c:]).astype(o_ref.dtype)


def _round_up(x, m):
    return ((x + m - 1) // m) * m


def _pad2d(x, rows, cols):
    r, c = x.shape
    return jnp.pad(x, ((0, rows - r), (0, cols - c)))


def _choose_k_tiling(K):
    """Return (K_pad, tk). Single K block for modest K, 512-wide tiles otherwise."""
    if K <= 2048:
        K_pad = _round_up(K, 8)
        return K_pad, K_pad
    tk = 512
    return _round_up(K, tk), tk


def _choose_tm(M, K_pad, Cp2):
    tm = 512
    # Prefer >=2 M tiles (megacore sharding) without dropping below 128 rows.
    while tm > 128 and _round_up(M, tm) // tm < 2:
        tm //= 2

    # Stay well under the scoped-VMEM default (16 MiB on v5e, 64 MiB VMEM on
    # v7x): double-buffered bf16 input/weight blocks + f32 output + accumulator.
    def vmem_bytes(t):
        return (2 * t * K_pad * 2            # patches block, bf16, double-buffered
                + 2 * K_pad * Cp2 * 2        # fused weight block, bf16
                + 2 * Cp2 * 4                # bias
                + 2 * t * (Cp2 // 2) * 4     # output block, f32
                + t * Cp2 * 4)               # accumulator scratch, f32

    while tm > 8 and vmem_bytes(tm) > 12 * 1024 * 1024:
        tm //= 2
    return tm


def mfm_matmul(patches, w0, w1, b0, b1):
    """patches: (M, K); w0/w1: (K, Cout); b0/b1: (1, Cout) -> (M, Cout) f32."""
    M, K = patches.shape
    cout = w0.shape[1]
    cout_pad = _round_up(cout, 128)          # lane-dense output / MXU fill
    Cp2 = 2 * cout_pad

    K_pad, tk = _choose_k_tiling(K)
    tm = _choose_tm(M, K_pad, Cp2)
    M_pad = _round_up(M, tm)

    xp = _pad2d(patches, M_pad, K_pad).astype(jnp.bfloat16)
    wf = jnp.concatenate(
        [_pad2d(w0, K_pad, cout_pad), _pad2d(w1, K_pad, cout_pad)],
        axis=1).astype(jnp.bfloat16)                         # (K_pad, 2*Cout_pad)
    bf = jnp.concatenate(
        [_pad2d(b0, 1, cout_pad), _pad2d(b1, 1, cout_pad)],
        axis=1).astype(jnp.float32)                          # (1, 2*Cout_pad)

    grid = (M_pad // tm, K_pad // tk)
    cost = pl.CostEstimate(
        flops=2 * M_pad * K_pad * Cp2,
        transcendentals=0,
        bytes_accessed=(M_pad * K_pad * 2                     # patches (bf16)
                        + grid[0] * K_pad * Cp2 * 2           # weights per M tile
                        + Cp2 * 4
                        + M_pad * cout_pad * 4),              # output (f32)
    )

    out = pl.pallas_call(
        _mfm_matmul_kernel,
        out_shape=jax.ShapeDtypeStruct((M_pad, cout_pad), jnp.float32),
        grid_spec=pltpu.PrefetchScalarGridSpec(
            num_scalar_prefetch=0,
            grid=grid,
            in_specs=[
                pl.BlockSpec((tm, tk), lambda i, k: (i, k)),
                pl.BlockSpec((tk, Cp2), lambda i, k: (k, 0)),
                pl.BlockSpec((1, Cp2), lambda i, k: (0, 0)),
            ],
            out_specs=pl.BlockSpec((tm, cout_pad), lambda i, k: (i, 0)),
            scratch_shapes=[pltpu.VMEM((tm, Cp2), jnp.float32)],
        ),
        compiler_params=pltpu.CompilerParams(
            dimension_semantics=("parallel", "arbitrary")),
        cost_estimate=cost,
    )(xp, wf, bf)

    return out[:M, :cout]


# ---------------------------------------------------------------------------
# Plain-JAX glue: im2col patch extraction and layout plumbing (NHWC inside)
# ---------------------------------------------------------------------------
def _im2col(x_nhwc, kh, kw, stride, padding):
    N, H, W, C = x_nhwc.shape
    xp = jnp.pad(x_nhwc, ((0, 0), (padding, padding), (padding, padding), (0, 0)))
    Ho = (H + 2 * padding - kh) // stride + 1
    Wo = (W + 2 * padding - kw) // stride + 1
    cols = []
    for i in range(kh):
        for j in range(kw):
            sl = xp[:, i:i + (Ho - 1) * stride + 1:stride,
                    j:j + (Wo - 1) * stride + 1:stride, :]
            cols.append(sl)
    # patch order: (kh, kw, cin) -- matches weight transposed to (Kh,Kw,Cin,Cout)
    patches = jnp.concatenate(cols, axis=-1)
    return patches.reshape(N * Ho * Wo, kh * kw * C), (N, Ho, Wo)


def mfm_conv_block_nhwc(x_nhwc, w_full, b_full, kernel_size, stride, padding):
    """One mfm_block (type=1): Conv2d(in, 2*out) + channel-split max. NHWC in/out."""
    cout2 = w_full.shape[0]
    cout = cout2 // 2
    N, H, W, Cin = x_nhwc.shape

    x_bf16 = x_nhwc.astype(jnp.bfloat16)     # halve HBM traffic of the patches
    if kernel_size == 1 and stride == 1 and padding == 0:
        patches = x_bf16.reshape(N * H * W, Cin)          # 1x1 conv: no im2col
        Ho, Wo = H, W
    else:
        patches, (_, Ho, Wo) = _im2col(x_bf16, kernel_size, kernel_size,
                                       stride, padding)

    # PyTorch conv weight is (2*Cout, Cin, Kh, Kw); reorder to (Kh*Kw*Cin, 2*Cout)
    w = jnp.transpose(w_full, (2, 3, 1, 0)).reshape(
        kernel_size * kernel_size * Cin, cout2)
    w0, w1 = w[:, :cout], w[:, cout:]
    b0 = b_full[:cout].reshape(1, cout)
    b1 = b_full[cout:].reshape(1, cout)

    out = mfm_matmul(patches, w0, w1, b0, b1)             # (N*Ho*Wo, Cout) f32
    return out.reshape(N, Ho, Wo, cout)                    # NHWC


@partial(jax.jit, static_argnames=("kernel_size", "stride", "padding"))
def mfm_group_forward(x_nchw, params, kernel_size, stride, padding):
    """mfm_group: conv_a = mfm_block(Cin, Cin, 1, 1, 0); conv = mfm_block(Cin, Cout, k, s, p)."""
    x = jnp.transpose(x_nchw, (0, 2, 3, 1))               # NCHW -> NHWC, once
    x = mfm_conv_block_nhwc(x, params["wa"], params["ba"], 1, 1, 0)
    x = mfm_conv_block_nhwc(x, params["w"], params["b"],
                            kernel_size, stride, padding)
    return jnp.transpose(x, (0, 3, 1, 2))                  # NHWC -> NCHW, once


# ---------------------------------------------------------------------------
# Deterministic parameter init (xavier_normal_ weights, zero biases)
# ---------------------------------------------------------------------------
def _xavier_normal_conv(key, shape):
    # shape = (out_ch, in_ch, kh, kw); torch xavier: std = sqrt(2/(fan_in+fan_out))
    fan_in = shape[1] * shape[2] * shape[3]
    fan_out = shape[0] * shape[2] * shape[3]
    std = math.sqrt(2.0 / (fan_in + fan_out))
    return std * jax.random.normal(key, shape, dtype=jnp.float32)


def init_mfm_group_params(key, in_channels, out_channels, kernel_size):
    ka, kb = jax.random.split(key)
    wa = _xavier_normal_conv(ka, (2 * in_channels, in_channels, 1, 1))
    ba = jnp.zeros((2 * in_channels,), jnp.float32)
    w = _xavier_normal_conv(kb, (2 * out_channels, in_channels, kernel_size, kernel_size))
    b = jnp.zeros((2 * out_channels,), jnp.float32)
    return {"wa": wa, "ba": ba, "w": w, "b": b}


# ---------------------------------------------------------------------------
# Pure-JAX reference (lax.conv, f32) used only as a correctness check
# ---------------------------------------------------------------------------
def _ref_mfm_conv(x, w, b, stride, padding):
    y = jax.lax.conv_general_dilated(
        x, w, (stride, stride), [(padding, padding)] * 2,
        dimension_numbers=("NCHW", "OIHW", "NCHW")) + b.reshape(1, -1, 1, 1)
    c = w.shape[0] // 2
    return jnp.maximum(y[:, :c], y[:, c:])


def _ref_mfm_group(x, params, kernel_size, stride, padding):
    x = _ref_mfm_conv(x, params["wa"], params["ba"], 1, 0)
    return _ref_mfm_conv(x, params["w"], params["b"], stride, padding)


if __name__ == "__main__":
    # Small shapes: N=2, Cin=4, H=W=16; out_channels=8, kernel=3, stride=1, pad=1
    N, Cin, H, W = 2, 4, 16, 16
    Cout, K, S, P = 8, 3, 1, 1

    key = jax.random.PRNGKey(0)
    kx, kp = jax.random.split(key)
    x = jax.random.normal(kx, (N, Cin, H, W), dtype=jnp.float32)
    params = init_mfm_group_params(kp, Cin, Cout, K)

    out = mfm_group_forward(x, params, K, S, P)
    out = jax.block_until_ready(out)

    ref = jax.block_until_ready(_ref_mfm_group(x, params, K, S, P))
    assert out.shape == (N, Cout, H, W), out.shape
    # bf16 operands in the kernel path vs f32 lax.conv reference -> loose tol.
    assert jnp.allclose(out, ref, atol=3e-2, rtol=3e-2), "mismatch vs lax.conv reference"

    print("KERNEL_OK")
</pallas_src>

<mosaic_0001>
module attributes {stable_mosaic.version = 11 : i64} {
  func.func @_mfm_matmul_kernel(%arg0: i32, %arg1: i32, %arg2: memref<256x8xbf16, #tpu.memory_space<vmem>>, %arg3: memref<8x256xbf16, #tpu.memory_space<vmem>>, %arg4: memref<1x256xf32, #tpu.memory_space<vmem>>, %arg5: memref<256x128xf32, #tpu.memory_space<vmem>>, %arg6: memref<256x256xf32, #tpu.memory_space<vmem>>) attributes {dimension_semantics = [#tpu.dimension_semantics<parallel>, #tpu.dimension_semantics<arbitrary>], iteration_bounds = array<i64: 2, 1>, scalar_prefetch = 0 : i64, scratch_operands = 1 : i64, tpu.core_type = #tpu.core_type<tc>, window_params = [{transform_indices = @transform_0, window_bounds = array<i64: 256, 8>}, {transform_indices = @transform_1, window_bounds = array<i64: 8, 256>}, {pipeline_mode = #tpu.pipeline_mode<synchronous>, transform_indices = @transform_2, window_bounds = array<i64: 1, 256>}, {transform_indices = @transform_3, window_bounds = array<i64: 256, 128>}]} {
    %c0_i32 = arith.constant 0 : i32
    %0 = arith.cmpi eq, %arg1, %c0_i32 : i32
    %1 = arith.extui %0 : i1 to i32
    %c0_i32_0 = arith.constant 0 : i32
    %2 = arith.cmpi ne, %1, %c0_i32_0 : i32
    scf.if %2 {
      %cst_10 = arith.constant 0.000000e+00 : f32
      %12 = vector.broadcast %cst_10 : f32 to vector<256x256xf32>
      %c0_11 = arith.constant 0 : index
      %c0_12 = arith.constant 0 : index
      %13 = vector.load %arg6[%c0_11, %c0_12] : memref<256x256xf32, #tpu.memory_space<vmem>>, vector<256x256xf32>
      tpu.vector_store %arg6[%c0_11, %c0_12], %12 {strides = array<i32>} : memref<256x256xf32, #tpu.memory_space<vmem>>, vector<256x256xf32>,
    } else {
    }
    %c0 = arith.constant 0 : index
    %c0_1 = arith.constant 0 : index
    %3 = vector.load %arg6[%c0, %c0_1] : memref<256x256xf32, #tpu.memory_space<vmem>>, vector<256x256xf32>
    %c0_2 = arith.constant 0 : index
    %c0_3 = arith.constant 0 : index
    %4 = vector.load %arg2[%c0_2, %c0_3] : memref<256x8xbf16, #tpu.memory_space<vmem>>, vector<256x8xbf16>
    %c0_4 = arith.constant 0 : index
    %c0_5 = arith.constant 0 : index
    %5 = vector.load %arg3[%c0_4, %c0_5] : memref<8x256xbf16, #tpu.memory_space<vmem>>, vector<8x256xbf16>
    %cst = arith.constant dense<0.000000e+00> : vector<256x256xf32>
    %6 = tpu.matmul %4, %5, %cst {dimension_numbers = #tpu.dot_dimension_numbers<[1], [0], [0], [1], [0, 0, 1, 1], [], []>} : vector<256x8xbf16>, vector<8x256xbf16>, vector<256x256xf32> -> vector<256x256xf32>
    %7 = arith.addf %3, %6 : vector<256x256xf32>
    %c0_6 = arith.constant 0 : index
    %c0_7 = arith.constant 0 : index
    %8 = vector.load %arg6[%c0_6, %c0_7] : memref<256x256xf32, #tpu.memory_space<vmem>>, vector<256x256xf32>
    tpu.vector_store %arg6[%c0_6, %c0_7], %7 {strides = array<i32>} : memref<256x256xf32, #tpu.memory_space<vmem>>, vector<256x256xf32>,
    %c0_i32_8 = arith.constant 0 : i32
    %9 = arith.cmpi eq, %arg1, %c0_i32_8 : i32
    %10 = arith.extui %9 : i1 to i32
    %c0_i32_9 = arith.constant 0 : i32
    %11 = arith.cmpi ne, %10, %c0_i32_9 : i32
    scf.if %11 {
      %c0_10 = arith.constant 0 : index
      %c0_11 = arith.constant 0 : index
      %12 = vector.load %arg6[%c0_10, %c0_11] : memref<256x256xf32, #tpu.memory_space<vmem>>, vector<256x256xf32>
      %c0_12 = arith.constant 0 : index
      %c0_13 = arith.constant 0 : index
      %13 = vector.load %arg4[%c0_12, %c0_13] : memref<1x256xf32, #tpu.memory_space<vmem>>, vector<1x256xf32>
      %14 = vector.broadcast %13 : vector<1x256xf32> to vector<256x256xf32>
      %15 = arith.addf %12, %14 : vector<256x256xf32>
      %16 = vector.extract_strided_slice %15 {offsets = [0, 0], sizes = [256, 128], strides = [1, 1]} : vector<256x256xf32> to vector<256x128xf32>
      %17 = vector.extract_strided_slice %15 {offsets = [0, 128], sizes = [256, 128], strides = [1, 1]} : vector<256x256xf32> to vector<256x128xf32>
      %18 = arith.maximumf %16, %17 : vector<256x128xf32>
      %c0_14 = arith.constant 0 : index
      %c0_15 = arith.constant 0 : index
      %19 = vector.load %arg5[%c0_14, %c0_15] : memref<256x128xf32, #tpu.memory_space<vmem>>, vector<256x128xf32>
      tpu.vector_store %arg5[%c0_14, %c0_15], %18 {strides = array<i32>} : memref<256x128xf32, #tpu.memory_space<vmem>>, vector<256x128xf32>,
    } else {
    }
    return
  }
  func.func @transform_0(%arg0: i32, %arg1: i32) -> (i32, i32) {
    %c0_i32 = arith.constant 0 : i32
    return %arg0, %arg1 : i32, i32
  }
  func.func @transform_1(%arg0: i32, %arg1: i32) -> (i32, i32) {
    %c0_i32 = arith.constant 0 : i32
    %c0_i32_0 = arith.constant 0 : i32
    return %arg1, %c0_i32 : i32, i32
  }
  func.func @transform_2(%arg0: i32, %arg1: i32) -> (i32, i32) {
    %c0_i32 = arith.constant 0 : i32
    %c0_i32_0 = arith.constant 0 : i32
    %c0_i32_1 = arith.constant 0 : i32
    return %c0_i32, %c0_i32_0 : i32, i32
  }
  func.func @transform_3(%arg0: i32, %arg1: i32) -> (i32, i32) {
    %c0_i32 = arith.constant 0 : i32
    %c0_i32_0 = arith.constant 0 : i32
    return %arg0, %c0_i32 : i32, i32
  }
}

module attributes {stable_mosaic.version = 11 : i64} {
  func.func @_mfm_matmul_kernel(%arg0: i32, %arg1: i32, %arg2: memref<256x40xbf16, #tpu.memory_space<vmem>>, %arg3: memref<40x256xbf16, #tpu.memory_space<vmem>>, %arg4: memref<1x256xf32, #tpu.memory_space<vmem>>, %arg5: memref<256x128xf32, #tpu.memory_space<vmem>>, %arg6: memref<256x256xf32, #tpu.memory_space<vmem>>) attributes {dimension_semantics = [#tpu.dimension_semantics<parallel>, #tpu.dimension_semantics<arbitrary>], iteration_bounds = array<i64: 2, 1>, scalar_prefetch = 0 : i64, scratch_operands = 1 : i64, tpu.core_type = #tpu.core_type<tc>, window_params = [{transform_indices = @transform_0, window_bounds = array<i64: 256, 40>}, {transform_indices = @transform_1, window_bounds = array<i64: 40, 256>}, {pipeline_mode = #tpu.pipeline_mode<synchronous>, transform_indices = @transform_2, window_bounds = array<i64: 1, 256>}, {transform_indices = @transform_3, window_bounds = array<i64: 256, 128>}]} {
    %c0_i32 = arith.constant 0 : i32
    %0 = arith.cmpi eq, %arg1, %c0_i32 : i32
    %1 = arith.extui %0 : i1 to i32
    %c0_i32_0 = arith.constant 0 : i32
    %2 = arith.cmpi ne, %1, %c0_i32_0 : i32
    scf.if %2 {
      %cst_10 = arith.constant 0.000000e+00 : f32
      %12 = vector.broadcast %cst_10 : f32 to vector<256x256xf32>
      %c0_11 = arith.constant 0 : index
      %c0_12 = arith.constant 0 : index
      %13 = vector.load %arg6[%c0_11, %c0_12] : memref<256x256xf32, #tpu.memory_space<vmem>>, vector<256x256xf32>
      tpu.vector_store %arg6[%c0_11, %c0_12], %12 {strides = array<i32>} : memref<256x256xf32, #tpu.memory_space<vmem>>, vector<256x256xf32>,
    } else {
    }
    %c0 = arith.constant 0 : index
    %c0_1 = arith.constant 0 : index
    %3 = vector.load %arg6[%c0, %c0_1] : memref<256x256xf32, #tpu.memory_space<vmem>>, vector<256x256xf32>
    %c0_2 = arith.constant 0 : index
    %c0_3 = arith.constant 0 : index
    %4 = vector.load %arg2[%c0_2, %c0_3] : memref<256x40xbf16, #tpu.memory_space<vmem>>, vector<256x40xbf16>
    %c0_4 = arith.constant 0 : index
    %c0_5 = arith.constant 0 : index
    %5 = vector.load %arg3[%c0_4, %c0_5] : memref<40x256xbf16, #tpu.memory_space<vmem>>, vector<40x256xbf16>
    %cst = arith.constant dense<0.000000e+00> : vector<256x256xf32>
    %6 = tpu.matmul %4, %5, %cst {dimension_numbers = #tpu.dot_dimension_numbers<[1], [0], [0], [1], [0, 0, 1, 1], [], []>} : vector<256x40xbf16>, vector<40x256xbf16>, vector<256x256xf32> -> vector<256x256xf32>
    %7 = arith.addf %3, %6 : vector<256x256xf32>
    %c0_6 = arith.constant 0 : index
    %c0_7 = arith.constant 0 : index
    %8 = vector.load %arg6[%c0_6, %c0_7] : memref<256x256xf32, #tpu.memory_space<vmem>>, vector<256x256xf32>
    tpu.vector_store %arg6[%c0_6, %c0_7], %7 {strides = array<i32>} : memref<256x256xf32, #tpu.memory_space<vmem>>, vector<256x256xf32>,
    %c0_i32_8 = arith.constant 0 : i32
    %9 = arith.cmpi eq, %arg1, %c0_i32_8 : i32
    %10 = arith.extui %9 : i1 to i32
    %c0_i32_9 = arith.constant 0 : i32
    %11 = arith.cmpi ne, %10, %c0_i32_9 : i32
    scf.if %11 {
      %c0_10 = arith.constant 0 : index
      %c0_11 = arith.constant 0 : index
      %12 = vector.load %arg6[%c0_10, %c0_11] : memref<256x256xf32, #tpu.memory_space<vmem>>, vector<256x256xf32>
      %c0_12 = arith.constant 0 : index
      %c0_13 = arith.constant 0 : index
      %13 = vector.load %arg4[%c0_12, %c0_13] : memref<1x256xf32, #tpu.memory_space<vmem>>, vector<1x256xf32>
      %14 = vector.broadcast %13 : vector<1x256xf32> to vector<256x256xf32>
      %15 = arith.addf %12, %14 : vector<256x256xf32>
      %16 = vector.extract_strided_slice %15 {offsets = [0, 0], sizes = [256, 128], strides = [1, 1]} : vector<256x256xf32> to vector<256x128xf32>
      %17 = vector.extract_strided_slice %15 {offsets = [0, 128], sizes = [256, 128], strides = [1, 1]} : vector<256x256xf32> to vector<256x128xf32>
      %18 = arith.maximumf %16, %17 : vector<256x128xf32>
      %c0_14 = arith.constant 0 : index
      %c0_15 = arith.constant 0 : index
      %19 = vector.load %arg5[%c0_14, %c0_15] : memref<256x128xf32, #tpu.memory_space<vmem>>, vector<256x128xf32>
      tpu.vector_store %arg5[%c0_14, %c0_15], %18 {strides = array<i32>} : memref<256x128xf32, #tpu.memory_space<vmem>>, vector<256x128xf32>,
    } else {
    }
    return
  }
  func.func @transform_0(%arg0: i32, %arg1: i32) -> (i32, i32) {
    %c0_i32 = arith.constant 0 : i32
    return %arg0, %arg1 : i32, i32
  }
  func.func @transform_1(%arg0: i32, %arg1: i32) -> (i32, i32) {
    %c0_i32 = arith.constant 0 : i32
    %c0_i32_0 = arith.constant 0 : i32
    return %arg1, %c0_i32 : i32, i32
  }
  func.func @transform_2(%arg0: i32, %arg1: i32) -> (i32, i32) {
    %c0_i32 = arith.constant 0 : i32
    %c0_i32_0 = arith.constant 0 : i32
    %c0_i32_1 = arith.constant 0 : i32
    return %c0_i32, %c0_i32_0 : i32, i32
  }
  func.func @transform_3(%arg0: i32, %arg1: i32) -> (i32, i32) {
    %c0_i32 = arith.constant 0 : i32
    %c0_i32_0 = arith.constant 0 : i32
    return %arg0, %c0_i32 : i32, i32
  }
}

</mosaic_0001>

<llo_original>
// kernel: mfm_group_forward.2
$region0: #{mfm_group_forward.2}
  #allocation0 [shape = 'u32[]', space=smem, size = 0x4, offset = 0x4, fixed_abs, tag = 'smem constant byte address 0x4 - core index']
  #allocation1 [shape = 'u32[144,128]{1,0:T(1,128)}', space=vmem, size = 0x12000, scoped, tag = 'internal scratch']
  #allocation2 [shape = 'f32[256,256]{1,0:T(8,128)}', space=vmem, size = 0x40000, scoped, tag = 'scratch operand']
  %s0 = inlined_call_operand.vmem [shape: bf16[512,8], index: 0, kind: input, shape index: {}]
  %s1 = inlined_call_operand.vmem [shape: bf16[8,256], index: 1, kind: input, shape index: {}]
  %s2 = inlined_call_operand.vmem [shape: f32[1,256], index: 2, kind: input, shape index: {}]
  %s3 = inlined_call_operand.vmem [shape: f32[512,128], index: 3, kind: output, shape index: {}]
  %s4 = sld [smem:[#allocation0]]
  $region53: #{mfm_group_forward.2} parent=0
    _
  %s6 = ssub.s32 1, %s4
  %s7 = scalar_select 0, %s6, %s4
  loop: start=0, step=1, limit=4
  $region2: #{mfm_group_forward.2} parent=0 // loop_pre_header
    _
  $region3: #{mfm_group_forward.2} parent=0 // loop_header
    %s9 = sphi 0, %s13
    %p10 = scmp.ge.s32.totalorder %s9, 4
    %s16 = sphi 0, %s28
    %s17 = sphi 0, %s24
    %s18 = sphi 0, %s16
    %s19 = sphi 0, %s17
    %s20 = sphi 0, %s18
    %s21 = sphi 0, %s19
    %s33 = sphi 0, %s35
    %s36 = sphi 0, %s33
    %s37 = sphi 0, %s36
    %s53 = sphi 0, %s37
    %s59 = sphi 0, %s61
    %s62 = sphi 0, %s59
    %s63 = sphi 0, %s62
    %s79 = sphi 0, %s63
    %s83 = sphi 0, %s83
    %s85 = sphi 0, %s83
    %s86 = sphi 0, %s85
    %s100 = sphi 0, %s86
    %s106 = sphi 0, %s108
    %s109 = sphi 0, %s106
    %s110 = sphi 0, %s109
    %s126 = sphi 0, %s110
  $region4: #{mfm_group_forward.2} parent=0 // loop_header_branch
    %12 = sbr.rel (%p10) target = $region8
  $region5: #{mfm_group_forward.2} parent=0 // loop_body
    %s14 = ssub.s32 %s9, 1
    %s15 = ssub.s32 %s9, 2
    %s22 = sadd.s32 1, %s17
    %p23 = scmp.ge.s32.totalorder %s22, 1
    %s24 = scalar_select %p23, 0, %s22
    %s25 = sadd.s32 1, %s16
    %s26 = scalar_select %p23, %s25, %s16
    %p27 = scmp.ge.s32.totalorder %s26, 2
    %s28 = scalar_select %p27, 0, %s26
    %s29 = ssub.s32 %s16, %s28
    %s30 = ssub.s32 %s17, %s24
    %s31 = sor.u32 %s29, %s30
    %p32 = scmp.eq.s32.totalorder %s31, 0
    %s34 = sadd.s32 %s33, 1
    %s35 = scalar_select %p32, %s33, %s34
    %p38 = pneg %p32
    %p39 = scmp.eq.s32.totalorder %s9, 1
    %p40 = por %p38, %p39
    %p41 = scmp.ne.s32.totalorder %s33, %s36
    %p42 = scmp.eq.s32.totalorder %s9, 0
    %p43 = por %p41, %p42
    %p44 = scmp.ne.s32.totalorder %s33, %s36
    %p45 = scmp.eq.s32.totalorder %s14, 1
    %p46 = por %p44, %p45
    %p47 = scmp.ne.s32.totalorder %s36, %s37
    %p48 = scmp.eq.s32.totalorder %s14, 0
    %p49 = por %p47, %p48
    %p50 = scmp.ne.s32.totalorder %s36, %s37
    %p51 = scmp.eq.s32.totalorder %s15, 1
    %p52 = por %p50, %p51
    %p54 = scmp.ne.s32.totalorder %s37, %s53
    %p55 = scmp.eq.s32.totalorder %s15, 0
    %p56 = por %p54, %p55
    %s57 = ssub.s32 %s17, %s24
    %p58 = scmp.eq.s32.totalorder %s57, 0
    %s60 = sadd.s32 %s59, 1
    %s61 = scalar_select %p58, %s59, %s60
    %p64 = pneg %p58
    %p65 = scmp.eq.s32.totalorder %s9, 1
    %p66 = por %p64, %p65
    %p67 = scmp.ne.s32.totalorder %s59, %s62
    %p68 = scmp.eq.s32.totalorder %s9, 0
    %p69 = por %p67, %p68
    %p70 = scmp.ne.s32.totalorder %s59, %s62
    %p71 = scmp.eq.s32.totalorder %s14, 1
    %p72 = por %p70, %p71
    %p73 = scmp.ne.s32.totalorder %s62, %s63
    %p74 = scmp.eq.s32.totalorder %s14, 0
    %p75 = por %p73, %p74
    %p76 = scmp.ne.s32.totalorder %s62, %s63
    %p77 = scmp.eq.s32.totalorder %s15, 1
    %p78 = por %p76, %p77
    %p80 = scmp.ne.s32.totalorder %s63, %s79
    %p81 = scmp.eq.s32.totalorder %s15, 0
    %p82 = por %p80, %p81
    %s84 = sadd.s32 %s83, 1
    %p87 = scmp.eq.s32.totalorder %s9, 1
    %p88 = scmp.ne.s32.totalorder %s83, %s85
    %p89 = scmp.eq.s32.totalorder %s9, 0
    %p90 = por %p88, %p89
    %p91 = scmp.ne.s32.totalorder %s83, %s85
    %p92 = scmp.eq.s32.totalorder %s14, 1
    %p93 = por %p91, %p92
    %p94 = scmp.ne.s32.totalorder %s85, %s86
    %p95 = scmp.eq.s32.totalorder %s14, 0
    %p96 = por %p94, %p95
    %p97 = scmp.ne.s32.totalorder %s85, %s86
    %p98 = scmp.eq.s32.totalorder %s15, 1
    %p99 = por %p97, %p98
    %p101 = scmp.ne.s32.totalorder %s86, %s100
    %p102 = scmp.eq.s32.totalorder %s15, 0
    %p103 = por %p101, %p102
    %s104 = ssub.s32 %s16, %s28
    %p105 = scmp.eq.s32.totalorder %s104, 0
    %s107 = sadd.s32 %s106, 1
    %s108 = scalar_select %p105, %s106, %s107
    %p111 = pneg %p105
    %p112 = scmp.eq.s32.totalorder %s9, 1
    %p113 = por %p111, %p112
    %p114 = scmp.ne.s32.totalorder %s106, %s109
    %p115 = scmp.eq.s32.totalorder %s9, 0
    %p116 = por %p114, %p115
    %p117 = scmp.ne.s32.totalorder %s106, %s109
    %p118 = scmp.eq.s32.totalorder %s14, 1
    %p119 = por %p117, %p118
    %p120 = scmp.ne.s32.totalorder %s109, %s110
    %p121 = scmp.eq.s32.totalorder %s14, 0
    %p122 = por %p120, %p121
    %p123 = scmp.ne.s32.totalorder %s109, %s110
    %p124 = scmp.eq.s32.totalorder %s15, 1
    %p125 = por %p123, %p124
    %p127 = scmp.ne.s32.totalorder %s110, %s126
    %p128 = scmp.eq.s32.totalorder %s15, 0
    %p129 = por %p127, %p128
    %p130 = scmp.le.s32.totalorder 1, %s9
    %p131 = scmp.lt.s32.totalorder %s9, 3
    %p132 = pnand %p130, %p131
    %p133 = pneg %p132
    // Predicated region
    $region9: #{mfm_group_forward.2} parent=5 // pred_check
      _
    $region10: #{mfm_group_forward.2} parent=5 // pred_check_branch
      %135 = sbr.rel (%p132) target = $region12
    $region11: #{mfm_group_forward.2} parent=5 // pred_region
      %s136 = ssub.s32 %s9, 1
      // Predicated region
      $region13: #{mfm_group_forward.2} parent=11 // pred_check
        %p137 = pneg %p75
      $region14: #{mfm_group_forward.2} parent=11 // pred_check_branch
        %139 = sbr.rel (%p137) target = $region16
      $region15: #{mfm_group_forward.2} parent=11 // pred_region
        %p140 = scmp.lt.s32.totalorder %s19, 0
        %s141 = scalar_select %p140, %s19, 0
        %s142 = smul.addr %s141, 2
        %s143 = smul.addr %s142, 4
        %s144 = scalar_lea.vmem %s1, %s143
      $region16: #{mfm_group_forward.2} parent=11 // pred_fallthru
        _
      // Predicated region
      $region17: #{mfm_group_forward.2} parent=11 // pred_check
        %p145 = pneg %p96
      $region18: #{mfm_group_forward.2} parent=11 // pred_check_branch
        %147 = sbr.rel (%p145) target = $region20
      $region19: #{mfm_group_forward.2} parent=11 // pred_region
        _
      $region20: #{mfm_group_forward.2} parent=11 // pred_fallthru
        _
    $region12: #{mfm_group_forward.2} parent=5 // pred_fallthru
      _
    %p148 = scmp.lt.s32.totalorder %s9, 2
    // Predicated region
    $region21: #{mfm_group_forward.2} parent=5 // pred_check
      %p149 = pneg %p148
    $region22: #{mfm_group_forward.2} parent=5 // pred_check_branch
      %151 = sbr.rel (%p149) target = $region24
    $region23: #{mfm_group_forward.2} parent=5 // pred_region
      // Predicated region
      $region25: #{mfm_group_forward.2} parent=23 // pred_check
        %p152 = pneg %p43
      $region26: #{mfm_group_forward.2} parent=23 // pred_check_branch
        %154 = sbr.rel (%p152) target = $region28
      $region27: #{mfm_group_forward.2} parent=23 // pred_region
        %s155 = smul.u32 32, %s16
        %p156 = scmp.lt.s32.totalorder %s155, 63
        %s157 = scalar_select %p156, %s155, 63
        %p158 = scmp.lt.s32.totalorder %s17, 0
        %s159 = scalar_select %p158, %s17, 0
        %s160 = sadd.s32 %s159, %s157
        %s161 = smul.addr %s160, 4
        %s162 = scalar_lea.vmem %s0, %s161
        %s163 = smul.u32 32, %s16
      $region28: #{mfm_group_forward.2} parent=23 // pred_fallthru
        _
    $region24: #{mfm_group_forward.2} parent=5 // pred_fallthru
      _
    %p164 = scmp.le.s32.totalorder 1, %s9
    %p165 = scmp.lt.s32.totalorder %s9, 3
    %p166 = pnand %p164, %p165
    %p167 = pneg %p166
    // Predicated region
    $region29: #{mfm_group_forward.2} parent=5 // pred_check
      _
    $region30: #{mfm_group_forward.2} parent=5 // pred_check_branch
      %169 = sbr.rel (%p166) target = $region32
    $region31: #{mfm_group_forward.2} parent=5 // pred_region
      %s170 = ssub.s32 %s9, 1
      %s171 = smul.u32 32, %s18
      %p172 = scmp.lt.s32.totalorder %s171, 63
      %s173 = scalar_select %p172, %s171, 63
      %p174 = scmp.lt.s32.totalorder %s19, 0
      %s175 = scalar_select %p174, %s19, 0
      %s176 = sadd.s32 %s175, %s173
      %s177 = smul.addr %s176, 4
      %s178 = scalar_lea.vmem %s0, %s177
      %p179 = pneg %p49
      %p180 = pneg %p46
      %p181 = scmp.lt.s32.totalorder %s19, 0
      %s182 = scalar_select %p181, %s19, 0
      %s183 = smul.addr %s182, 2
      %s184 = smul.addr %s183, 4
      %s185 = scalar_lea.vmem %s1, %s184
      %p186 = pneg %p75
      %p187 = pneg %p72
      %p188 = pneg %p96
      %p189 = pneg %p93
      %p190 = pneg %p122
      %p191 = pneg %p119
      %s192 = smul.u32 32, %s18
      %p193 = scmp.lt.s32.totalorder %s192, 63
      %s194 = scalar_select %p193, %s192, 63
      %s195 = smul.addr %s194, 8
      %s196 = scalar_lea.vmem %s3, %s195
      %s197 = smul.u32 32, %s18
      %p198 = scmp.lt.s32.totalorder %s197, 63
      %s199 = scalar_select %p198, %s197, 63
      %p200 = scmp.lt.s32.totalorder %s19, 0
      %s201 = scalar_select %p200, %s19, 0
      %s202 = sadd.s32 %s201, %s199
      %s203 = smul.addr %s202, 4
      %s204 = scalar_lea.vmem %s0, %s203
      %s205 = smul.u32 32, %s18
      %p206 = scmp.lt.s32.totalorder %s19, 0
      %s207 = scalar_select %p206, %s19, 0
      %s208 = smul.addr %s207, 2
      %s209 = smul.addr %s208, 4
      %s210 = scalar_lea.vmem %s1, %s209
      %s211 = smul.u32 32, %s18
      %p212 = scmp.lt.s32.totalorder %s211, 63
      %s213 = scalar_select %p212, %s211, 63
      %s214 = smul.addr %s213, 8
      %s215 = scalar_lea.vmem %s3, %s214
      %s216 = smul.u32 32, %s18
      %p218 = scmp.eq.s32.totalorder %s19, 0
      // Predicated region
      $region33: #{mfm_group_forward.2} parent=31 // pred_check
        %p219 = pneg %p218
      $region34: #{mfm_group_forward.2} parent=31 // pred_check_branch
        %221 = sbr.rel (%p219) target = $region36
      $region35: #{mfm_group_forward.2} parent=31 // pred_region
        %222 = vst [vmem:[#allocation2] sm:$0xff] 0.0
        %223 = vst [vmem:[#allocation2 + $0x8] sm:$0xff] 0.0
        %224 = vst [vmem:[#allocation2 + $0x10] sm:$0xff] 0.0
        %225 = vst [vmem:[#allocation2 + $0x18] sm:$0xff] 0.0
        %226 = vst [vmem:[#allocation2 + $0x20] sm:$0xff] 0.0
        %227 = vst [vmem:[#allocation2 + $0x28] sm:$0xff] 0.0
        %228 = vst [vmem:[#allocation2 + $0x30] sm:$0xff] 0.0
        %229 = vst [vmem:[#allocation2 + $0x38] sm:$0xff] 0.0
        %230 = vst [vmem:[#allocation2 + $0x40] sm:$0xff] 0.0
        %231 = vst [vmem:[#allocation2 + $0x48] sm:$0xff] 0.0
        %232 = vst [vmem:[#allocation2 + $0x50] sm:$0xff] 0.0
        %233 = vst [vmem:[#allocation2 + $0x58] sm:$0xff] 0.0
        %234 = vst [vmem:[#allocation2 + $0x60] sm:$0xff] 0.0
        %235 = vst [vmem:[#allocation2 + $0x68] sm:$0xff] 0.0
        %236 = vst [vmem:[#allocation2 + $0x70] sm:$0xff] 0.0
        %237 = vst [vmem:[#allocation2 + $0x78] sm:$0xff] 0.0
        %238 = vst [vmem:[#allocation2 + $0x80] sm:$0xff] 0.0
        %239 = vst [vmem:[#allocation2 + $0x88] sm:$0xff] 0.0
        %240 = vst [vmem:[#allocation2 + $0x90] sm:$0xff] 0.0
        %241 = vst [vmem:[#allocation2 + $0x98] sm:$0xff] 0.0
        %242 = vst [vmem:[#allocation2 + $0xa0] sm:$0xff] 0.0
        %243 = vst [vmem:[#allocation2 + $0xa8] sm:$0xff] 0.0
        %244 = vst [vmem:[#allocation2 + $0xb0] sm:$0xff] 0.0
        %245 = vst [vmem:[#allocation2 + $0xb8] sm:$0xff] 0.0
        %246 = vst [vmem:[#allocation2 + $0xc0] sm:$0xff] 0.0
        %247 = vst [vmem:[#allocation2 + $0xc8] sm:$0xff] 0.0
        %248 = vst [vmem:[#allocation2 + $0xd0] sm:$0xff] 0.0
        %249 = vst [vmem:[#allocation2 + $0xd8] sm:$0xff] 0.0
        %250 = vst [vmem:[#allocation2 + $0xe0] sm:$0xff] 0.0
        %251 = vst [vmem:[#allocation2 + $0xe8] sm:$0xff] 0.0
        %252 = vst [vmem:[#allocation2 + $0xf0] sm:$0xff] 0.0
        %253 = vst [vmem:[#allocation2 + $0xf8] sm:$0xff] 0.0
        %254 = vst [vmem:[#allocation2 + $0x100] sm:$0xff] 0.0
        %255 = vst [vmem:[#allocation2 + $0x108] sm:$0xff] 0.0
        %256 = vst [vmem:[#allocation2 + $0x110] sm:$0xff] 0.0
        %257 = vst [vmem:[#allocation2 + $0x118] sm:$0xff] 0.0
        %258 = vst [vmem:[#allocation2 + $0x120] sm:$0xff] 0.0
        %259 = vst [vmem:[#allocation2 + $0x128] sm:$0xff] 0.0
        %260 = vst [vmem:[#allocation2 + $0x130] sm:$0xff] 0.0
        %261 = vst [vmem:[#allocation2 + $0x138] sm:$0xff] 0.0
        %262 = vst [vmem:[#allocation2 + $0x140] sm:$0xff] 0.0
        %263 = vst [vmem:[#allocation2 + $0x148] sm:$0xff] 0.0
        %264 = vst [vmem:[#allocation2 + $0x150] sm:$0xff] 0.0
        %265 = vst [vmem:[#allocation2 + $0x158] sm:$0xff] 0.0
        %266 = vst [vmem:[#allocation2 + $0x160] sm:$0xff] 0.0
        %267 = vst [vmem:[#allocation2 + $0x168] sm:$0xff] 0.0
        %268 = vst [vmem:[#allocation2 + $0x170] sm:$0xff] 0.0
        %269 = vst [vmem:[#allocation2 + $0x178] sm:$0xff] 0.0
        %270 = vst [vmem:[#allocation2 + $0x180] sm:$0xff] 0.0
        %271 = vst [vmem:[#allocation2 + $0x188] sm:$0xff] 0.0
        %272 = vst [vmem:[#allocation2 + $0x190] sm:$0xff] 0.0
        %273 = vst [vmem:[#allocation2 + $0x198] sm:$0xff] 0.0
        %274 = vst [vmem:[#allocation2 + $0x1a0] sm:$0xff] 0.0
        %275 = vst [vmem:[#allocation2 + $0x1a8] sm:$0xff] 0.0
        %276 = vst [vmem:[#allocation2 + $0x1b0] sm:$0xff] 0.0
        %277 = vst [vmem:[#allocation2 + $0x1b8] sm:$0xff] 0.0
        %278 = vst [vmem:[#allocation2 + $0x1c0] sm:$0xff] 0.0
        %279 = vst [vmem:[#allocation2 + $0x1c8] sm:$0xff] 0.0
        %280 = vst [vmem:[#allocation2 + $0x1d0] sm:$0xff] 0.0
        %281 = vst [vmem:[#allocation2 + $0x1d8] sm:$0xff] 0.0
        %282 = vst [vmem:[#allocation2 + $0x1e0] sm:$0xff] 0.0
        %283 = vst [vmem:[#allocation2 + $0x1e8] sm:$0xff] 0.0
        %284 = vst [vmem:[#allocation2 + $0x1f0] sm:$0xff] 0.0
        %285 = vst [vmem:[#allocation2 + $0x1f8] sm:$0xff] 0.0
      $region36: #{mfm_group_forward.2} parent=31 // pred_fallthru
        _
      %v286 = vld [vmem:[#allocation2] sm:$0xff]
      %v287 = vld [vmem:[#allocation2 + $0x8] sm:$0xff]
      %v288 = vld [vmem:[#allocation2 + $0x10] sm:$0xff]
      %v289 = vld [vmem:[#allocation2 + $0x18] sm:$0xff]
      %v290 = vld [vmem:[#allocation2 + $0x20] sm:$0xff]
      %v291 = vld [vmem:[#allocation2 + $0x28] sm:$0xff]
      %v292 = vld [vmem:[#allocation2 + $0x30] sm:$0xff]
      %v293 = vld [vmem:[#allocation2 + $0x38] sm:$0xff]
      %v294 = vld [vmem:[#allocation2 + $0x40] sm:$0xff]
      %v295 = vld [vmem:[#allocation2 + $0x48] sm:$0xff]
      %v296 = vld [vmem:[#allocation2 + $0x50] sm:$0xff]
      %v297 = vld [vmem:[#allocation2 + $0x58] sm:$0xff]
      %v298 = vld [vmem:[#allocation2 + $0x60] sm:$0xff]
      %v299 = vld [vmem:[#allocation2 + $0x68] sm:$0xff]
      %v300 = vld [vmem:[#allocation2 + $0x70] sm:$0xff]
      %v301 = vld [vmem:[#allocation2 + $0x78] sm:$0xff]
      %v302 = vld [vmem:[#allocation2 + $0x80] sm:$0xff]
      %v303 = vld [vmem:[#allocation2 + $0x88] sm:$0xff]
      %v304 = vld [vmem:[#allocation2 + $0x90] sm:$0xff]
      %v305 = vld [vmem:[#allocation2 + $0x98] sm:$0xff]
      %v306 = vld [vmem:[#allocation2 + $0xa0] sm:$0xff]
      %v307 = vld [vmem:[#allocation2 + $0xa8] sm:$0xff]
      %v308 = vld [vmem:[#allocation2 + $0xb0] sm:$0xff]
      %v309 = vld [vmem:[#allocation2 + $0xb8] sm:$0xff]
      %v310 = vld [vmem:[#allocation2 + $0xc0] sm:$0xff]
      %v311 = vld [vmem:[#allocation2 + $0xc8] sm:$0xff]
      %v312 = vld [vmem:[#allocation2 + $0xd0] sm:$0xff]
      %v313 = vld [vmem:[#allocation2 + $0xd8] sm:$0xff]
      %v314 = vld [vmem:[#allocation2 + $0xe0] sm:$0xff]
      %v315 = vld [vmem:[#allocation2 + $0xe8] sm:$0xff]
      %v316 = vld [vmem:[#allocation2 + $0xf0] sm:$0xff]
      %v317 = vld [vmem:[#allocation2 + $0xf8] sm:$0xff]
      %v318 = vld [vmem:[#allocation2 + $0x100] sm:$0xff]
      %v319 = vld [vmem:[#allocation2 + $0x108] sm:$0xff]
      %v320 = vld [vmem:[#allocation2 + $0x110] sm:$0xff]
      %v321 = vld [vmem:[#allocation2 + $0x118] sm:$0xff]
      %v322 = vld [vmem:[#allocation2 + $0x120] sm:$0xff]
      %v323 = vld [vmem:[#allocation2 + $0x128] sm:$0xff]
      %v324 = vld [vmem:[#allocation2 + $0x130] sm:$0xff]
      %v325 = vld [vmem:[#allocation2 + $0x138] sm:$0xff]
      %v326 = vld [vmem:[#allocation2 + $0x140] sm:$0xff]
      %v327 = vld [vmem:[#allocation2 + $0x148] sm:$0xff]
      %v328 = vld [vmem:[#allocation2 + $0x150] sm:$0xff]
      %v329 = vld [vmem:[#allocation2 + $0x158] sm:$0xff]
      %v330 = vld [vmem:[#allocation2 + $0x160] sm:$0xff]
      %v331 = vld [vmem:[#allocation2 + $0x168] sm:$0xff]
      %v332 = vld [vmem:[#allocation2 + $0x170] sm:$0xff]
      %v333 = vld [vmem:[#allocation2 + $0x178] sm:$0xff]
      %v334 = vld [vmem:[#allocation2 + $0x180] sm:$0xff]
      %v335 = vld [vmem:[#allocation2 + $0x188] sm:$0xff]
      %v336 = vld [vmem:[#allocation2 + $0x190] sm:$0xff]
      %v337 = vld [vmem:[#allocation2 + $0x198] sm:$0xff]
      %v338 = vld [vmem:[#allocation2 + $0x1a0] sm:$0xff]
      %v339 = vld [vmem:[#allocation2 + $0x1a8] sm:$0xff]
      %v340 = vld [vmem:[#allocation2 + $0x1b0] sm:$0xff]
      %v341 = vld [vmem:[#allocation2 + $0x1b8] sm:$0xff]
      %v342 = vld [vmem:[#allocation2 + $0x1c0] sm:$0xff]
      %v343 = vld [vmem:[#allocation2 + $0x1c8] sm:$0xff]
      %v344 = vld [vmem:[#allocation2 + $0x1d0] sm:$0xff]
      %v345 = vld [vmem:[#allocation2 + $0x1d8] sm:$0xff]
      %v346 = vld [vmem:[#allocation2 + $0x1e0] sm:$0xff]
      %v347 = vld [vmem:[#allocation2 + $0x1e8] sm:$0xff]
      %v348 = vld [vmem:[#allocation2 + $0x1f0] sm:$0xff]
      %v349 = vld [vmem:[#allocation2 + $0x1f8] sm:$0xff]
      %v350 = vld [vmem:[%s204] sm:$0xf]
      %v351 = vld [vmem:[%s204 + $0x4] sm:$0xf]
      %v352 = vld [vmem:[%s204 + $0x8] sm:$0xf]
      %v353 = vld [vmem:[%s204 + $0xc] sm:$0xf]
      %v354 = vld [vmem:[%s204 + $0x10] sm:$0xf]
      %v355 = vld [vmem:[%s204 + $0x14] sm:$0xf]
      %v356 = vld [vmem:[%s204 + $0x18] sm:$0xf]
      %v357 = vld [vmem:[%s204 + $0x1c] sm:$0xf]
      %v358 = vld [vmem:[%s204 + $0x20] sm:$0xf]
      %v359 = vld [vmem:[%s204 + $0x24] sm:$0xf]
      %v360 = vld [vmem:[%s204 + $0x28] sm:$0xf]
      %v361 = vld [vmem:[%s204 + $0x2c] sm:$0xf]
      %v362 = vld [vmem:[%s204 + $0x30] sm:$0xf]
      %v363 = vld [vmem:[%s204 + $0x34] sm:$0xf]
      %v364 = vld [vmem:[%s204 + $0x38] sm:$0xf]
      %v365 = vld [vmem:[%s204 + $0x3c] sm:$0xf]
      %v366 = vld [vmem:[%s204 + $0x40] sm:$0xf]
      %v367 = vld [vmem:[%s204 + $0x44] sm:$0xf]
      %v368 = vld [vmem:[%s204 + $0x48] sm:$0xf]
      %v369 = vld [vmem:[%s204 + $0x4c] sm:$0xf]
      %v370 = vld [vmem:[%s204 + $0x50] sm:$0xf]
      %v371 = vld [vmem:[%s204 + $0x54] sm:$0xf]
      %v372 = vld [vmem:[%s204 + $0x58] sm:$0xf]
      %v373 = vld [vmem:[%s204 + $0x5c] sm:$0xf]
      %v374 = vld [vmem:[%s204 + $0x60] sm:$0xf]
      %v375 = vld [vmem:[%s204 + $0x64] sm:$0xf]
      %v376 = vld [vmem:[%s204 + $0x68] sm:$0xf]
      %v377 = vld [vmem:[%s204 + $0x6c] sm:$0xf]
      %v378 = vld [vmem:[%s204 + $0x70] sm:$0xf]
      %v379 = vld [vmem:[%s204 + $0x74] sm:$0xf]
      %v380 = vld [vmem:[%s204 + $0x78] sm:$0xf]
      %v381 = vld [vmem:[%s204 + $0x7c] sm:$0xf]
      %v382 = vld [vmem:[%s210] sm:$0xff]
      %v415 = vunpack.c.l.b16 %v350
      %v416 = vunpack.c.l.b16 %v351
      %v417 = vunpack.c.l.b16 %v352
      %v418 = vunpack.c.l.b16 %v353
      %v419 = vunpack.c.l.b16 %v354
      %v420 = vunpack.c.l.b16 %v355
      %v421 = vunpack.c.l.b16 %v356
      %v422 = vunpack.c.l.b16 %v357
      %v423 = vunpack.c.l.b16 %v358
      %v424 = vunpack.c.l.b16 %v359
      %v425 = vunpack.c.l.b16 %v360
      %v426 = vunpack.c.l.b16 %v361
      %v427 = vunpack.c.l.b16 %v362
      %v428 = vunpack.c.l.b16 %v363
      %v429 = vunpack.c.l.b16 %v364
      %v430 = vunpack.c.l.b16 %v365
      %v431 = vunpack.c.l.b16 %v366
      %v432 = vunpack.c.l.b16 %v367
      %v433 = vunpack.c.l.b16 %v368
      %v434 = vunpack.c.l.b16 %v369
      %v435 = vunpack.c.l.b16 %v370
      %v436 = vunpack.c.l.b16 %v371
      %v437 = vunpack.c.l.b16 %v372
      %v438 = vunpack.c.l.b16 %v373
      %v439 = vunpack.c.l.b16 %v374
      %v440 = vunpack.c.l.b16 %v375
      %v441 = vunpack.c.l.b16 %v376
      %v442 = vunpack.c.l.b16 %v377
      %v443 = vunpack.c.l.b16 %v378
      %v444 = vunpack.c.l.b16 %v379
      %v445 = vunpack.c.l.b16 %v380
      %v446 = vunpack.c.l.b16 %v381
      %v447 = vpack.c.b16 %v416, %v415
      %v448 = vpack.c.b16 %v418, %v417
      %v449 = vpack.c.b16 %v420, %v419
      %v450 = vpack.c.b16 %v422, %v421
      %v451 = vpack.c.b16 %v424, %v423
      %v452 = vpack.c.b16 %v426, %v425
      %v453 = vpack.c.b16 %v428, %v427
      %v454 = vpack.c.b16 %v430, %v429
      %v455 = vpack.c.b16 %v432, %v431
      %v456 = vpack.c.b16 %v434, %v433
      %v457 = vpack.c.b16 %v436, %v435
      %v458 = vpack.c.b16 %v438, %v437
      %v459 = vpack.c.b16 %v440, %v439
      %v460 = vpack.c.b16 %v442, %v441
      %v461 = vpack.c.b16 %v444, %v443
      %v462 = vpack.c.b16 %v446, %v445
      %v464 = vunpack.c.l.b16 %v382
      %v465 = vunpack.c.h.b16 %v382
      %v466 = vpack.c.b16 %v464, %v464
      %v467 = vpack.c.b16 %v465, %v465
      %vm468 = vcmask 64512
      %v470 = vsel %vm468, %v447, 0
      %v473 = vsel %vm468, %v448, 0
      %v476 = vsel %vm468, %v449, 0
      %v479 = vsel %vm468, %v450, 0
      %v482 = vsel %vm468, %v451, 0
      %v485 = vsel %vm468, %v452, 0
      %v488 = vsel %vm468, %v453, 0
      %v491 = vsel %vm468, %v454, 0
      %v494 = vsel %vm468, %v455, 0
      %v497 = vsel %vm468, %v456, 0
      %v500 = vsel %vm468, %v457, 0
      %v503 = vsel %vm468, %v458, 0
      %v506 = vsel %vm468, %v459, 0
      %v509 = vsel %vm468, %v460, 0
      %v512 = vsel %vm468, %v461, 0
      %v515 = vsel %vm468, %v462, 0
      %vm517 = vcmask 1043456
      %v519 = vsel %vm517, %v466, 0
      %v522 = vsel %vm517, %v467, 0
      %524 = vmatprep.subr.bf16.mxu0 0
      %525 = vmatpush1.bf16.msra.mxu0 0
      %526 = vmatprep.subr.bf16.mxu0 0
      %527 = vmatpush1.bf16.msra.mxu0 0
      %528 = vmatprep.subr.bf16.mxu0 0
      %529 = vmatpush1.bf16.msra.mxu0 0
      %530 = vmatprep.subr.bf16.mxu0 0
      %531 = vmatpush1.bf16.msra.mxu0 0
      %532 = vmatprep.subr.bf16.mxu0 0
      %533 = vmatpush1.bf16.msra.mxu0 0
      %534 = vmatprep.subr.bf16.mxu0 0
      %535 = vmatpush1.bf16.msra.mxu0 0
      %536 = vmatprep.subr.bf16.mxu0 0
      %537 = vmatpush1.bf16.msra.mxu0 0
      %538 = vmatprep.subr.bf16.mxu0 %v522
      %539 = vmatpush1.bf16.msra.mxu0 %v519
      %540 = vmatprep.subr.bf16.mxu0 0
      %541 = vmatpush2.bf16.msra.mxu0 0
      %542 = vmatprep.subr.bf16.mxu0 0
      %543 = vmatpush2.bf16.msra.mxu0 0
      %544 = vmatprep.subr.bf16.mxu0 0
      %545 = vmatpush2.bf16.msra.mxu0 0
      %546 = vmatprep.subr.bf16.mxu0 0
      %547 = vmatpush2.bf16.msra.mxu0 0
      %548 = vmatprep.subr.bf16.mxu0 0
      %549 = vmatpush2.bf16.msra.mxu0 0
      %550 = vmatprep.subr.bf16.mxu0 0
      %551 = vmatpush2.bf16.msra.mxu0 0
      %552 = vmatprep.subr.bf16.mxu0 0
      %553 = vmatpush2.bf16.msra.mxu0 0
      %554 = vmatprep.subr.bf16.mxu0 0
      %555 = vmatpush2.bf16.msra.mxu0 0
      %556 = vmatprep.mubr.bf16.mxu0 0
      %557 = vmatmul.mubr.bf16.gmra.mxu0 %v470
      %v558 = vpop.f32.mrf.mxu0
      %v559 = vadd.f32 0.0, %v558
      %v560 = vpop.f32.mrf.mxu0
      %v561 = vadd.f32 0.0, %v560
      %v562 = vpop.f32.mrf.mxu0
      %v563 = vadd.f32 0.0, %v562
      %v564 = vpop.f32.mrf.mxu0
      %v565 = vadd.f32 0.0, %v564
      %566 = vmatprep.mubr.bf16.mxu0 0
      %567 = vmatmul.mubr.bf16.gmra.mxu0 %v473
      %v568 = vpop.f32.mrf.mxu0
      %v569 = vadd.f32 0.0, %v568
      %v570 = vpop.f32.mrf.mxu0
      %v571 = vadd.f32 0.0, %v570
      %v572 = vpop.f32.mrf.mxu0
      %v573 = vadd.f32 0.0, %v572
      %v574 = vpop.f32.mrf.mxu0
      %v575 = vadd.f32 0.0, %v574
      %576 = vmatprep.mubr.bf16.mxu0 0
      %577 = vmatmul.mubr.bf16.gmra.mxu0 %v476
      %v578 = vpop.f32.mrf.mxu0
      %v579 = vadd.f32 0.0, %v578
      %v580 = vpop.f32.mrf.mxu0
      %v581 = vadd.f32 0.0, %v580
      %v582 = vpop.f32.mrf.mxu0
      %v583 = vadd.f32 0.0, %v582
      %v584 = vpop.f32.mrf.mxu0
      %v585 = vadd.f32 0.0, %v584
      %586 = vmatprep.mubr.bf16.mxu0 0
      %587 = vmatmul.mubr.bf16.gmra.mxu0 %v479
      %v588 = vpop.f32.mrf.mxu0
      %v589 = vadd.f32 0.0, %v588
      %v590 = vpop.f32.mrf.mxu0
      %v591 = vadd.f32 0.0, %v590
      %v592 = vpop.f32.mrf.mxu0
      %v593 = vadd.f32 0.0, %v592
      %v594 = vpop.f32.mrf.mxu0
      %v595 = vadd.f32 0.0, %v594
      %596 = vmatprep.mubr.bf16.mxu0 0
      %597 = vmatmul.mubr.bf16.gmra.mxu0 %v482
      %v598 = vpop.f32.mrf.mxu0
      %v599 = vadd.f32 0.0, %v598
      %v600 = vpop.f32.mrf.mxu0
      %v601 = vadd.f32 0.0, %v600
      %v602 = vpop.f32.mrf.mxu0
      %v603 = vadd.f32 0.0, %v602
      %v604 = vpop.f32.mrf.mxu0
      %v605 = vadd.f32 0.0, %v604
      %606 = vmatprep.mubr.bf16.mxu0 0
      %607 = vmatmul.mubr.bf16.gmra.mxu0 %v485
      %v608 = vpop.f32.mrf.mxu0
      %v609 = vadd.f32 0.0, %v608
      %v610 = vpop.f32.mrf.mxu0
      %v611 = vadd.f32 0.0, %v610
      %v612 = vpop.f32.mrf.mxu0
      %v613 = vadd.f32 0.0, %v612
      %v614 = vpop.f32.mrf.mxu0
      %v615 = vadd.f32 0.0, %v614
      %616 = vmatprep.mubr.bf16.mxu0 0
      %617 = vmatmul.mubr.bf16.gmra.mxu0 %v488
      %v618 = vpop.f32.mrf.mxu0
      %v619 = vadd.f32 0.0, %v618
      %v620 = vpop.f32.mrf.mxu0
      %v621 = vadd.f32 0.0, %v620
      %v622 = vpop.f32.mrf.mxu0
      %v623 = vadd.f32 0.0, %v622
      %v624 = vpop.f32.mrf.mxu0
      %v625 = vadd.f32 0.0, %v624
      %626 = vmatprep.mubr.bf16.mxu0 0
      %627 = vmatmul.mubr.bf16.gmra.mxu0 %v491
      %v628 = vpop.f32.mrf.mxu0
      %v629 = vadd.f32 0.0, %v628
      %v630 = vpop.f32.mrf.mxu0
      %v631 = vadd.f32 0.0, %v630
      %v632 = vpop.f32.mrf.mxu0
      %v633 = vadd.f32 0.0, %v632
      %v634 = vpop.f32.mrf.mxu0
      %v635 = vadd.f32 0.0, %v634
      %636 = vmatprep.mubr.bf16.mxu0 0
      %637 = vmatmul.mubr.bf16.gmra.mxu0 %v494
      %v638 = vpop.f32.mrf.mxu0
      %v639 = vadd.f32 0.0, %v638
      %v640 = vpop.f32.mrf.mxu0
      %v641 = vadd.f32 0.0, %v640
      %v642 = vpop.f32.mrf.mxu0
      %v643 = vadd.f32 0.0, %v642
      %v644 = vpop.f32.mrf.mxu0
      %v645 = vadd.f32 0.0, %v644
      %646 = vmatprep.mubr.bf16.mxu0 0
      %647 = vmatmul.mubr.bf16.gmra.mxu0 %v497
      %v648 = vpop.f32.mrf.mxu0
      %v649 = vadd.f32 0.0, %v648
      %v650 = vpop.f32.mrf.mxu0
      %v651 = vadd.f32 0.0, %v650
      %v652 = vpop.f32.mrf.mxu0
      %v653 = vadd.f32 0.0, %v652
      %v654 = vpop.f32.mrf.mxu0
      %v655 = vadd.f32 0.0, %v654
      %656 = vmatprep.mubr.bf16.mxu0 0
      %657 = vmatmul.mubr.bf16.gmra.mxu0 %v500
      %v658 = vpop.f32.mrf.mxu0
      %v659 = vadd.f32 0.0, %v658
      %v660 = vpop.f32.mrf.mxu0
      %v661 = vadd.f32 0.0, %v660
      %v662 = vpop.f32.mrf.mxu0
      %v663 = vadd.f32 0.0, %v662
      %v664 = vpop.f32.mrf.mxu0
      %v665 = vadd.f32 0.0, %v664
      %666 = vmatprep.mubr.bf16.mxu0 0
      %667 = vmatmul.mubr.bf16.gmra.mxu0 %v503
      %v668 = vpop.f32.mrf.mxu0
      %v669 = vadd.f32 0.0, %v668
      %v670 = vpop.f32.mrf.mxu0
      %v671 = vadd.f32 0.0, %v670
      %v672 = vpop.f32.mrf.mxu0
      %v673 = vadd.f32 0.0, %v672
      %v674 = vpop.f32.mrf.mxu0
      %v675 = vadd.f32 0.0, %v674
      %676 = vmatprep.mubr.bf16.mxu0 0
      %677 = vmatmul.mubr.bf16.gmra.mxu0 %v506
      %v678 = vpop.f32.mrf.mxu0
      %v679 = vadd.f32 0.0, %v678
      %v680 = vpop.f32.mrf.mxu0
      %v681 = vadd.f32 0.0, %v680
      %v682 = vpop.f32.mrf.mxu0
      %v683 = vadd.f32 0.0, %v682
      %v684 = vpop.f32.mrf.mxu0
      %v685 = vadd.f32 0.0, %v684
      %686 = vmatprep.mubr.bf16.mxu0 0
      %687 = vmatmul.mubr.bf16.gmra.mxu0 %v509
      %v688 = vpop.f32.mrf.mxu0
      %v689 = vadd.f32 0.0, %v688
      %v690 = vpop.f32.mrf.mxu0
      %v691 = vadd.f32 0.0, %v690
      %v692 = vpop.f32.mrf.mxu0
      %v693 = vadd.f32 0.0, %v692
      %v694 = vpop.f32.mrf.mxu0
      %v695 = vadd.f32 0.0, %v694
      %696 = vmatprep.mubr.bf16.mxu0 0
      %697 = vmatmul.mubr.bf16.gmra.mxu0 %v512
      %v698 = vpop.f32.mrf.mxu0
      %v699 = vadd.f32 0.0, %v698
      %v700 = vpop.f32.mrf.mxu0
      %v701 = vadd.f32 0.0, %v700
      %v702 = vpop.f32.mrf.mxu0
      %v703 = vadd.f32 0.0, %v702
      %v704 = vpop.f32.mrf.mxu0
      %v705 = vadd.f32 0.0, %v704
      %706 = vmatprep.mubr.bf16.mxu0 0
      %707 = vmatmul.mubr.bf16.gmra.mxu0 %v515
      %v708 = vpop.f32.mrf.mxu0
      %v709 = vadd.f32 0.0, %v708
      %v710 = vpop.f32.mrf.mxu0
      %v711 = vadd.f32 0.0, %v710
      %v712 = vpop.f32.mrf.mxu0
      %v713 = vadd.f32 0.0, %v712
      %v714 = vpop.f32.mrf.mxu0
      %v715 = vadd.f32 0.0, %v714
      %716 = vdwg.mxu0
      %v717 = vadd.f32 %v286, %v559
      %v718 = vadd.f32 %v287, %v561
      %v719 = vadd.f32 %v288, %v563
      %v720 = vadd.f32 %v289, %v565
      %v721 = vadd.f32 %v290, %v569
      %v722 = vadd.f32 %v291, %v571
      %v723 = vadd.f32 %v292, %v573
      %v724 = vadd.f32 %v293, %v575
      %v725 = vadd.f32 %v294, %v579
      %v726 = vadd.f32 %v295, %v581
      %v727 = vadd.f32 %v296, %v583
      %v728 = vadd.f32 %v297, %v585
      %v729 = vadd.f32 %v298, %v589
      %v730 = vadd.f32 %v299, %v591
      %v731 = vadd.f32 %v300, %v593
      %v732 = vadd.f32 %v301, %v595
      %v733 = vadd.f32 %v302, %v599
      %v734 = vadd.f32 %v303, %v601
      %v735 = vadd.f32 %v304, %v603
      %v736 = vadd.f32 %v305, %v605
      %v737 = vadd.f32 %v306, %v609
      %v738 = vadd.f32 %v307, %v611
      %v739 = vadd.f32 %v308, %v613
      %v740 = vadd.f32 %v309, %v615
      %v741 = vadd.f32 %v310, %v619
      %v742 = vadd.f32 %v311, %v621
      %v743 = vadd.f32 %v312, %v623
      %v744 = vadd.f32 %v313, %v625
      %v745 = vadd.f32 %v314, %v629
      %v746 = vadd.f32 %v315, %v631
      %v747 = vadd.f32 %v316, %v633
      %v748 = vadd.f32 %v317, %v635
      %v749 = vadd.f32 %v318, %v639
      %v750 = vadd.f32 %v319, %v641
      %v751 = vadd.f32 %v320, %v643
      %v752 = vadd.f32 %v321, %v645
      %v753 = vadd.f32 %v322, %v649
      %v754 = vadd.f32 %v323, %v651
      %v755 = vadd.f32 %v324, %v653
      %v756 = vadd.f32 %v325, %v655
      %v757 = vadd.f32 %v326, %v659
      %v758 = vadd.f32 %v327, %v661
      %v759 = vadd.f32 %v328, %v663
      %v760 = vadd.f32 %v329, %v665
      %v761 = vadd.f32 %v330, %v669
      %v762 = vadd.f32 %v331, %v671
      %v763 = vadd.f32 %v332, %v673
      %v764 = vadd.f32 %v333, %v675
      %v765 = vadd.f32 %v334, %v679
      %v766 = vadd.f32 %v335, %v681
      %v767 = vadd.f32 %v336, %v683
      %v768 = vadd.f32 %v337, %v685
      %v769 = vadd.f32 %v338, %v689
      %v770 = vadd.f32 %v339, %v691
      %v771 = vadd.f32 %v340, %v693
      %v772 = vadd.f32 %v341, %v695
      %v773 = vadd.f32 %v342, %v699
      %v774 = vadd.f32 %v343, %v701
      %v775 = vadd.f32 %v344, %v703
      %v776 = vadd.f32 %v345, %v705
      %v777 = vadd.f32 %v346, %v709
      %v778 = vadd.f32 %v347, %v711
      %v779 = vadd.f32 %v348, %v713
      %v780 = vadd.f32 %v349, %v715
      %781 = vst [vmem:[#allocation2] sm:$0xff] %v717
      %782 = vst [vmem:[#allocation2 + $0x8] sm:$0xff] %v718
      %783 = vst [vmem:[#allocation2 + $0x10] sm:$0xff] %v719
      %784 = vst [vmem:[#allocation2 + $0x18] sm:$0xff] %v720
      %785 = vst [vmem:[#allocation2 + $0x20] sm:$0xff] %v721
      %786 = vst [vmem:[#allocation2 + $0x28] sm:$0xff] %v722
      %787 = vst [vmem:[#allocation2 + $0x30] sm:$0xff] %v723
      %788 = vst [vmem:[#allocation2 + $0x38] sm:$0xff] %v724
      %789 = vst [vmem:[#allocation2 + $0x40] sm:$0xff] %v725
      %790 = vst [vmem:[#allocation2 + $0x48] sm:$0xff] %v726
      %791 = vst [vmem:[#allocation2 + $0x50] sm:$0xff] %v727
      %792 = vst [vmem:[#allocation2 + $0x58] sm:$0xff] %v728
      %793 = vst [vmem:[#allocation2 + $0x60] sm:$0xff] %v729
      %794 = vst [vmem:[#allocation2 + $0x68] sm:$0xff] %v730
      %795 = vst [vmem:[#allocation2 + $0x70] sm:$0xff] %v731
      %796 = vst [vmem:[#allocation2 + $0x78] sm:$0xff] %v732
      %797 = vst [vmem:[#allocation2 + $0x80] sm:$0xff] %v733
      %798 = vst [vmem:[#allocation2 + $0x88] sm:$0xff] %v734
      %799 = vst [vmem:[#allocation2 + $0x90] sm:$0xff] %v735
      %800 = vst [vmem:[#allocation2 + $0x98] sm:$0xff] %v736
      %801 = vst [vmem:[#allocation2 + $0xa0] sm:$0xff] %v737
      %802 = vst [vmem:[#allocation2 + $0xa8] sm:$0xff] %v738
      %803 = vst [vmem:[#allocation2 + $0xb0] sm:$0xff] %v739
      %804 = vst [vmem:[#allocation2 + $0xb8] sm:$0xff] %v740
      %805 = vst [vmem:[#allocation2 + $0xc0] sm:$0xff] %v741
      %806 = vst [vmem:[#allocation2 + $0xc8] sm:$0xff] %v742
      %807 = vst [vmem:[#allocation2 + $0xd0] sm:$0xff] %v743
      %808 = vst [vmem:[#allocation2 + $0xd8] sm:$0xff] %v744
      %809 = vst [vmem:[#allocation2 + $0xe0] sm:$0xff] %v745
      %810 = vst [vmem:[#allocation2 + $0xe8] sm:$0xff] %v746
      %811 = vst [vmem:[#allocation2 + $0xf0] sm:$0xff] %v747
      %812 = vst [vmem:[#allocation2 + $0xf8] sm:$0xff] %v748
      %813 = vst [vmem:[#allocation2 + $0x100] sm:$0xff] %v749
      %814 = vst [vmem:[#allocation2 + $0x108] sm:$0xff] %v750
      %815 = vst [vmem:[#allocation2 + $0x110] sm:$0xff] %v751
      %816 = vst [vmem:[#allocation2 + $0x118] sm:$0xff] %v752
      %817 = vst [vmem:[#allocation2 + $0x120] sm:$0xff] %v753
      %818 = vst [vmem:[#allocation2 + $0x128] sm:$0xff] %v754
      %819 = vst [vmem:[#allocation2 + $0x130] sm:$0xff] %v755
      %820 = vst [vmem:[#allocation2 + $0x138] sm:$0xff] %v756
      %821 = vst [vmem:[#allocation2 + $0x140] sm:$0xff] %v757
      %822 = vst [vmem:[#allocation2 + $0x148] sm:$0xff] %v758
      %823 = vst [vmem:[#allocation2 + $0x150] sm:$0xff] %v759
      %824 = vst [vmem:[#allocation2 + $0x158] sm:$0xff] %v760
      %825 = vst [vmem:[#allocation2 + $0x160] sm:$0xff] %v761
      %826 = vst [vmem:[#allocation2 + $0x168] sm:$0xff] %v762
      %827 = vst [vmem:[#allocation2 + $0x170] sm:$0xff] %v763
      %828 = vst [vmem:[#allocation2 + $0x178] sm:$0xff] %v764
      %829 = vst [vmem:[#allocation2 + $0x180] sm:$0xff] %v765
      %830 = vst [vmem:[#allocation2 + $0x188] sm:$0xff] %v766
      %831 = vst [vmem:[#allocation2 + $0x190] sm:$0xff] %v767
      %832 = vst [vmem:[#allocation2 + $0x198] sm:$0xff] %v768
      %833 = vst [vmem:[#allocation2 + $0x1a0] sm:$0xff] %v769
      %834 = vst [vmem:[#allocation2 + $0x1a8] sm:$0xff] %v770
      %835 = vst [vmem:[#allocation2 + $0x1b0] sm:$0xff] %v771
      %836 = vst [vmem:[#allocation2 + $0x1b8] sm:$0xff] %v772
      %837 = vst [vmem:[#allocation2 + $0x1c0] sm:$0xff] %v773
      %838 = vst [vmem:[#allocation2 + $0x1c8] sm:$0xff] %v774
      %839 = vst [vmem:[#allocation2 + $0x1d0] sm:$0xff] %v775
      %840 = vst [vmem:[#allocation2 + $0x1d8] sm:$0xff] %v776
      %841 = vst [vmem:[#allocation2 + $0x1e0] sm:$0xff] %v777
      %842 = vst [vmem:[#allocation2 + $0x1e8] sm:$0xff] %v778
      %843 = vst [vmem:[#allocation2 + $0x1f0] sm:$0xff] %v779
      %844 = vst [vmem:[#allocation2 + $0x1f8] sm:$0xff] %v780
      // Predicated region
      $region37: #{mfm_group_forward.2} parent=31 // pred_check
        %p845 = pneg %p218
      $region38: #{mfm_group_forward.2} parent=31 // pred_check_branch
        %847 = sbr.rel (%p845) target = $region40
      $region39: #{mfm_group_forward.2} parent=31 // pred_region
        %v848 = vld [vmem:[#allocation2] sm:$0xff]
        %v849 = vld [vmem:[#allocation2 + $0x8] sm:$0xff]
        %v850 = vld [vmem:[#allocation2 + $0x10] sm:$0xff]
        %v851 = vld [vmem:[#allocation2 + $0x18] sm:$0xff]
        %v852 = vld [vmem:[#allocation2 + $0x20] sm:$0xff]
        %v853 = vld [vmem:[#allocation2 + $0x28] sm:$0xff]
        %v854 = vld [vmem:[#allocation2 + $0x30] sm:$0xff]
        %v855 = vld [vmem:[#allocation2 + $0x38] sm:$0xff]
        %v856 = vld [vmem:[#allocation2 + $0x40] sm:$0xff]
        %v857 = vld [vmem:[#allocation2 + $0x48] sm:$0xff]
        %v858 = vld [vmem:[#allocation2 + $0x50] sm:$0xff]
        %v859 = vld [vmem:[#allocation2 + $0x58] sm:$0xff]
        %v860 = vld [vmem:[#allocation2 + $0x60] sm:$0xff]
        %v861 = vld [vmem:[#allocation2 + $0x68] sm:$0xff]
        %v862 = vld [vmem:[#allocation2 + $0x70] sm:$0xff]
        %v863 = vld [vmem:[#allocation2 + $0x78] sm:$0xff]
        %v864 = vld [vmem:[#allocation2 + $0x80] sm:$0xff]
        %v865 = vld [vmem:[#allocation2 + $0x88] sm:$0xff]
        %v866 = vld [vmem:[#allocation2 + $0x90] sm:$0xff]
        %v867 = vld [vmem:[#allocation2 + $0x98] sm:$0xff]
        %v868 = vld [vmem:[#allocation2 + $0xa0] sm:$0xff]
        %v869 = vld [vmem:[#allocation2 + $0xa8] sm:$0xff]
        %v870 = vld [vmem:[#allocation2 + $0xb0] sm:$0xff]
        %v871 = vld [vmem:[#allocation2 + $0xb8] sm:$0xff]
        %v872 = vld [vmem:[#allocation2 + $0xc0] sm:$0xff]
        %v873 = vld [vmem:[#allocation2 + $0xc8] sm:$0xff]
        %v874 = vld [vmem:[#allocation2 + $0xd0] sm:$0xff]
        %v875 = vld [vmem:[#allocation2 + $0xd8] sm:$0xff]
        %v876 = vld [vmem:[#allocation2 + $0xe0] sm:$0xff]
        %v877 = vld [vmem:[#allocation2 + $0xe8] sm:$0xff]
        %v878 = vld [vmem:[#allocation2 + $0xf0] sm:$0xff]
        %v879 = vld [vmem:[#allocation2 + $0xf8] sm:$0xff]
        %v880 = vld [vmem:[#allocation2 + $0x100] sm:$0xff]
        %v881 = vld [vmem:[#allocation2 + $0x108] sm:$0xff]
        %v882 = vld [vmem:[#allocation2 + $0x110] sm:$0xff]
        %v883 = vld [vmem:[#allocation2 + $0x118] sm:$0xff]
        %v884 = vld [vmem:[#allocation2 + $0x120] sm:$0xff]
        %v885 = vld [vmem:[#allocation2 + $0x128] sm:$0xff]
        %v886 = vld [vmem:[#allocation2 + $0x130] sm:$0xff]
        %v887 = vld [vmem:[#allocation2 + $0x138] sm:$0xff]
        %v888 = vld [vmem:[#allocation2 + $0x140] sm:$0xff]
        %v889 = vld [vmem:[#allocation2 + $0x148] sm:$0xff]
        %v890 = vld [vmem:[#allocation2 + $0x150] sm:$0xff]
        %v891 = vld [vmem:[#allocation2 + $0x158] sm:$0xff]
        %v892 = vld [vmem:[#allocation2 + $0x160] sm:$0xff]
        %v893 = vld [vmem:[#allocation2 + $0x168] sm:$0xff]
        %v894 = vld [vmem:[#allocation2 + $0x170] sm:$0xff]
        %v895 = vld [vmem:[#allocation2 + $0x178] sm:$0xff]
        %v896 = vld [vmem:[#allocation2 + $0x180] sm:$0xff]
        %v897 = vld [vmem:[#allocation2 + $0x188] sm:$0xff]
        %v898 = vld [vmem:[#allocation2 + $0x190] sm:$0xff]
        %v899 = vld [vmem:[#allocation2 + $0x198] sm:$0xff]
        %v900 = vld [vmem:[#allocation2 + $0x1a0] sm:$0xff]
        %v901 = vld [vmem:[#allocation2 + $0x1a8] sm:$0xff]
        %v902 = vld [vmem:[#allocation2 + $0x1b0] sm:$0xff]
        %v903 = vld [vmem:[#allocation2 + $0x1b8] sm:$0xff]
        %v904 = vld [vmem:[#allocation2 + $0x1c0] sm:$0xff]
        %v905 = vld [vmem:[#allocation2 + $0x1c8] sm:$0xff]
        %v906 = vld [vmem:[#allocation2 + $0x1d0] sm:$0xff]
        %v907 = vld [vmem:[#allocation2 + $0x1d8] sm:$0xff]
        %v908 = vld [vmem:[#allocation2 + $0x1e0] sm:$0xff]
        %v909 = vld [vmem:[#allocation2 + $0x1e8] sm:$0xff]
        %v910 = vld [vmem:[#allocation2 + $0x1f0] sm:$0xff]
        %v911 = vld [vmem:[#allocation2 + $0x1f8] sm:$0xff]
        %v912 = vld [vmem:[%s2] sm:$0x3]
        %v914 = vlaneseq
        %v915 = vshrl.u32 %v914, 7
        %v916 = vsub.s32 0, %v915
        %v917 = vrot.slane %v912, %v916
        %v918 = vlaneseq
        %v919 = vshrl.u32 %v918, 7
        %v920 = vsub.s32 1, %v919
        %v921 = vrot.slane %v912, %v920
        %v924 = vadd.f32 %v848, %v917
        %v925 = vadd.f32 %v849, %v921
        %v926 = vadd.f32 %v850, %v917
        %v927 = vadd.f32 %v851, %v921
        %v928 = vadd.f32 %v852, %v917
        %v929 = vadd.f32 %v853, %v921
        %v930 = vadd.f32 %v854, %v917
        %v931 = vadd.f32 %v855, %v921
        %v932 = vadd.f32 %v856, %v917
        %v933 = vadd.f32 %v857, %v921
        %v934 = vadd.f32 %v858, %v917
        %v935 = vadd.f32 %v859, %v921
        %v936 = vadd.f32 %v860, %v917
        %v937 = vadd.f32 %v861, %v921
        %v938 = vadd.f32 %v862, %v917
        %v939 = vadd.f32 %v863, %v921
        %v940 = vadd.f32 %v864, %v917
        %v941 = vadd.f32 %v865, %v921
        %v942 = vadd.f32 %v866, %v917
        %v943 = vadd.f32 %v867, %v921
        %v944 = vadd.f32 %v868, %v917
        %v945 = vadd.f32 %v869, %v921
        %v946 = vadd.f32 %v870, %v917
        %v947 = vadd.f32 %v871, %v921
        %v948 = vadd.f32 %v872, %v917
        %v949 = vadd.f32 %v873, %v921
        %v950 = vadd.f32 %v874, %v917
        %v951 = vadd.f32 %v875, %v921
        %v952 = vadd.f32 %v876, %v917
        %v953 = vadd.f32 %v877, %v921
        %v954 = vadd.f32 %v878, %v917
        %v955 = vadd.f32 %v879, %v921
        %v956 = vadd.f32 %v880, %v917
        %v957 = vadd.f32 %v881, %v921
        %v958 = vadd.f32 %v882, %v917
        %v959 = vadd.f32 %v883, %v921
        %v960 = vadd.f32 %v884, %v917
        %v961 = vadd.f32 %v885, %v921
        %v962 = vadd.f32 %v886, %v917
        %v963 = vadd.f32 %v887, %v921
        %v964 = vadd.f32 %v888, %v917
        %v965 = vadd.f32 %v889, %v921
        %v966 = vadd.f32 %v890, %v917
        %v967 = vadd.f32 %v891, %v921
        %v968 = vadd.f32 %v892, %v917
        %v969 = vadd.f32 %v893, %v921
        %v970 = vadd.f32 %v894, %v917
        %v971 = vadd.f32 %v895, %v921
        %v972 = vadd.f32 %v896, %v917
        %v973 = vadd.f32 %v897, %v921
        %v974 = vadd.f32 %v898, %v917
        %v975 = vadd.f32 %v899, %v921
        %v976 = vadd.f32 %v900, %v917
        %v977 = vadd.f32 %v901, %v921
        %v978 = vadd.f32 %v902, %v917
        %v979 = vadd.f32 %v903, %v921
        %v980 = vadd.f32 %v904, %v917
        %v981 = vadd.f32 %v905, %v921
        %v982 = vadd.f32 %v906, %v917
        %v983 = vadd.f32 %v907, %v921
        %v984 = vadd.f32 %v908, %v917
        %v985 = vadd.f32 %v909, %v921
        %v986 = vadd.f32 %v910, %v917
        %v987 = vadd.f32 %v911, %v921
        %v988 = vmax.f32 %v924, %v925
        %v989 = vmax.f32 %v926, %v927
        %v990 = vmax.f32 %v928, %v929
        %v991 = vmax.f32 %v930, %v931
        %v992 = vmax.f32 %v932, %v933
        %v993 = vmax.f32 %v934, %v935
        %v994 = vmax.f32 %v936, %v937
        %v995 = vmax.f32 %v938, %v939
        %v996 = vmax.f32 %v940, %v941
        %v997 = vmax.f32 %v942, %v943
        %v998 = vmax.f32 %v944, %v945
        %v999 = vmax.f32 %v946, %v947
        %v1000 = vmax.f32 %v948, %v949
        %v1001 = vmax.f32 %v950, %v951
        %v1002 = vmax.f32 %v952, %v953
        %v1003 = vmax.f32 %v954, %v955
        %v1004 = vmax.f32 %v956, %v957
        %v1005 = vmax.f32 %v958, %v959
        %v1006 = vmax.f32 %v960, %v961
        %v1007 = vmax.f32 %v962, %v963
        %v1008 = vmax.f32 %v964, %v965
        %v1009 = vmax.f32 %v966, %v967
        %v1010 = vmax.f32 %v968, %v969
        %v1011 = vmax.f32 %v970, %v971
        %v1012 = vmax.f32 %v972, %v973
        %v1013 = vmax.f32 %v974, %v975
        %v1014 = vmax.f32 %v976, %v977
        %v1015 = vmax.f32 %v978, %v979
        %v1016 = vmax.f32 %v980, %v981
        %v1017 = vmax.f32 %v982, %v983
        %v1018 = vmax.f32 %v984, %v985
        %v1019 = vmax.f32 %v986, %v987
        %1020 = vst [vmem:[%s215] sm:$0xff] %v988
        %1021 = vst [vmem:[%s215 + $0x8] sm:$0xff] %v989
        %1022 = vst [vmem:[%s215 + $0x10] sm:$0xff] %v990
        %1023 = vst [vmem:[%s215 + $0x18] sm:$0xff] %v991
        %1024 = vst [vmem:[%s215 + $0x20] sm:$0xff] %v992
        %1025 = vst [vmem:[%s215 + $0x28] sm:$0xff] %v993
        %1026 = vst [vmem:[%s215 + $0x30] sm:$0xff] %v994
        %1027 = vst [vmem:[%s215 + $0x38] sm:$0xff] %v995
        %1028 = vst [vmem:[%s215 + $0x40] sm:$0xff] %v996
        %1029 = vst [vmem:[%s215 + $0x48] sm:$0xff] %v997
        %1030 = vst [vmem:[%s215 + $0x50] sm:$0xff] %v998
        %1031 = vst [vmem:[%s215 + $0x58] sm:$0xff] %v999
        %1032 = vst [vmem:[%s215 + $0x60] sm:$0xff] %v1000
        %1033 = vst [vmem:[%s215 + $0x68] sm:$0xff] %v1001
        %1034 = vst [vmem:[%s215 + $0x70] sm:$0xff] %v1002
        %1035 = vst [vmem:[%s215 + $0x78] sm:$0xff] %v1003
        %1036 = vst [vmem:[%s215 + $0x80] sm:$0xff] %v1004
        %1037 = vst [vmem:[%s215 + $0x88] sm:$0xff] %v1005
        %1038 = vst [vmem:[%s215 + $0x90] sm:$0xff] %v1006
        %1039 = vst [vmem:[%s215 + $0x98] sm:$0xff] %v1007
        %1040 = vst [vmem:[%s215 + $0xa0] sm:$0xff] %v1008
        %1041 = vst [vmem:[%s215 + $0xa8] sm:$0xff] %v1009
        %1042 = vst [vmem:[%s215 + $0xb0] sm:$0xff] %v1010
        %1043 = vst [vmem:[%s215 + $0xb8] sm:$0xff] %v1011
        %1044 = vst [vmem:[%s215 + $0xc0] sm:$0xff] %v1012
        %1045 = vst [vmem:[%s215 + $0xc8] sm:$0xff] %v1013
        %1046 = vst [vmem:[%s215 + $0xd0] sm:$0xff] %v1014
        %1047 = vst [vmem:[%s215 + $0xd8] sm:$0xff] %v1015
        %1048 = vst [vmem:[%s215 + $0xe0] sm:$0xff] %v1016
        %1049 = vst [vmem:[%s215 + $0xe8] sm:$0xff] %v1017
        %1050 = vst [vmem:[%s215 + $0xf0] sm:$0xff] %v1018
        %1051 = vst [vmem:[%s215 + $0xf8] sm:$0xff] %v1019
      $region40: #{mfm_group_forward.2} parent=31 // pred_fallthru
        _
      %s1052 = smul.u32 32, %s18
      %p1053 = scmp.lt.s32.totalorder %s1052, 63
      %s1054 = scalar_select %p1053, %s1052, 63
      %s1055 = smul.addr %s1054, 8
      %s1056 = scalar_lea.vmem %s3, %s1055
      // Predicated region
      $region41: #{mfm_group_forward.2} parent=31 // pred_check
        %p1057 = pneg %p119
      $region42: #{mfm_group_forward.2} parent=31 // pred_check_branch
        %1059 = sbr.rel (%p1057) target = $region44
      $region43: #{mfm_group_forward.2} parent=31 // pred_region
        %s1060 = smul.u32 32, %s18
      $region44: #{mfm_group_forward.2} parent=31 // pred_fallthru
        _
    $region32: #{mfm_group_forward.2} parent=5 // pred_fallthru
      _
    %p1061 = scmp.le.s32.totalorder 2, %s9
    // Predicated region
    $region45: #{mfm_group_forward.2} parent=5 // pred_check
      %p1062 = pneg %p1061
    $region46: #{mfm_group_forward.2} parent=5 // pred_check_branch
      %1064 = sbr.rel (%p1062) target = $region48
    $region47: #{mfm_group_forward.2} parent=5 // pred_region
      %s1065 = ssub.s32 %s9, 2
      // Predicated region
      $region49: #{mfm_group_forward.2} parent=47 // pred_check
        %p1066 = pneg %p125
      $region50: #{mfm_group_forward.2} parent=47 // pred_check_branch
        %1068 = sbr.rel (%p1066) target = $region52
      $region51: #{mfm_group_forward.2} parent=47 // pred_region
        %s1069 = smul.u32 32, %s20
        %p1070 = scmp.lt.s32.totalorder %s1069, 63
        %s1071 = scalar_select %p1070, %s1069, 63
        %s1072 = smul.addr %s1071, 8
        %s1073 = scalar_lea.vmem %s3, %s1072
      $region52: #{mfm_group_forward.2} parent=47 // pred_fallthru
        _
    $region48: #{mfm_group_forward.2} parent=5 // pred_fallthru
      _
  $region6: #{mfm_group_forward.2} parent=0 // loop_footer
    %s13 = sadd.s32 1, %s9
  $region7: #{mfm_group_forward.2} parent=0 // loop_footer_branch
    %8 = sbr.rel target = $region3
  $region8: #{mfm_group_forward.2} parent=0 // loop_exit
    _

// kernel: mfm_group_forward.3
$region0: #{mfm_group_forward.3}
  #allocation0 [shape = 'u32[]', space=smem, size = 0x4, offset = 0x4, fixed_abs, tag = 'smem constant byte address 0x4 - core index']
  #allocation1 [shape = 'u32[144,128]{1,0:T(1,128)}', space=vmem, size = 0x12000, scoped, tag = 'internal scratch']
  #allocation2 [shape = 'f32[256,256]{1,0:T(8,128)}', space=vmem, size = 0x40000, scoped, tag = 'scratch operand']
  %s0 = inlined_call_operand.vmem [shape: bf16[512,40], index: 0, kind: input, shape index: {}]
  %s1 = inlined_call_operand.vmem [shape: bf16[40,256], index: 1, kind: input, shape index: {}]
  %s2 = inlined_call_operand.vmem [shape: f32[1,256], index: 2, kind: input, shape index: {}]
  %s3 = inlined_call_operand.vmem [shape: f32[512,128], index: 3, kind: output, shape index: {}]
  %s4 = sld [smem:[#allocation0]]
  $region53: #{mfm_group_forward.3} parent=0
    _
  %s6 = ssub.s32 1, %s4
  %s7 = scalar_select 0, %s6, %s4
  loop: start=0, step=1, limit=4
  $region2: #{mfm_group_forward.3} parent=0 // loop_pre_header
    _
  $region3: #{mfm_group_forward.3} parent=0 // loop_header
    %s9 = sphi 0, %s13
    %p10 = scmp.ge.s32.totalorder %s9, 4
    %s16 = sphi 0, %s28
    %s17 = sphi 0, %s24
    %s18 = sphi 0, %s16
    %s19 = sphi 0, %s17
    %s20 = sphi 0, %s18
    %s21 = sphi 0, %s19
    %s33 = sphi 0, %s35
    %s36 = sphi 0, %s33
    %s37 = sphi 0, %s36
    %s53 = sphi 0, %s37
    %s59 = sphi 0, %s61
    %s62 = sphi 0, %s59
    %s63 = sphi 0, %s62
    %s79 = sphi 0, %s63
    %s83 = sphi 0, %s83
    %s85 = sphi 0, %s83
    %s86 = sphi 0, %s85
    %s100 = sphi 0, %s86
    %s106 = sphi 0, %s108
    %s109 = sphi 0, %s106
    %s110 = sphi 0, %s109
    %s126 = sphi 0, %s110
  $region4: #{mfm_group_forward.3} parent=0 // loop_header_branch
    %12 = sbr.rel (%p10) target = $region8
  $region5: #{mfm_group_forward.3} parent=0 // loop_body
    %s14 = ssub.s32 %s9, 1
    %s15 = ssub.s32 %s9, 2
    %s22 = sadd.s32 1, %s17
    %p23 = scmp.ge.s32.totalorder %s22, 1
    %s24 = scalar_select %p23, 0, %s22
    %s25 = sadd.s32 1, %s16
    %s26 = scalar_select %p23, %s25, %s16
    %p27 = scmp.ge.s32.totalorder %s26, 2
    %s28 = scalar_select %p27, 0, %s26
    %s29 = ssub.s32 %s16, %s28
    %s30 = ssub.s32 %s17, %s24
    %s31 = sor.u32 %s29, %s30
    %p32 = scmp.eq.s32.totalorder %s31, 0
    %s34 = sadd.s32 %s33, 1
    %s35 = scalar_select %p32, %s33, %s34
    %p38 = pneg %p32
    %p39 = scmp.eq.s32.totalorder %s9, 1
    %p40 = por %p38, %p39
    %p41 = scmp.ne.s32.totalorder %s33, %s36
    %p42 = scmp.eq.s32.totalorder %s9, 0
    %p43 = por %p41, %p42
    %p44 = scmp.ne.s32.totalorder %s33, %s36
    %p45 = scmp.eq.s32.totalorder %s14, 1
    %p46 = por %p44, %p45
    %p47 = scmp.ne.s32.totalorder %s36, %s37
    %p48 = scmp.eq.s32.totalorder %s14, 0
    %p49 = por %p47, %p48
    %p50 = scmp.ne.s32.totalorder %s36, %s37
    %p51 = scmp.eq.s32.totalorder %s15, 1
    %p52 = por %p50, %p51
    %p54 = scmp.ne.s32.totalorder %s37, %s53
    %p55 = scmp.eq.s32.totalorder %s15, 0
    %p56 = por %p54, %p55
    %s57 = ssub.s32 %s17, %s24
    %p58 = scmp.eq.s32.totalorder %s57, 0
    %s60 = sadd.s32 %s59, 1
    %s61 = scalar_select %p58, %s59, %s60
    %p64 = pneg %p58
    %p65 = scmp.eq.s32.totalorder %s9, 1
    %p66 = por %p64, %p65
    %p67 = scmp.ne.s32.totalorder %s59, %s62
    %p68 = scmp.eq.s32.totalorder %s9, 0
    %p69 = por %p67, %p68
    %p70 = scmp.ne.s32.totalorder %s59, %s62
    %p71 = scmp.eq.s32.totalorder %s14, 1
    %p72 = por %p70, %p71
    %p73 = scmp.ne.s32.totalorder %s62, %s63
    %p74 = scmp.eq.s32.totalorder %s14, 0
    %p75 = por %p73, %p74
    %p76 = scmp.ne.s32.totalorder %s62, %s63
    %p77 = scmp.eq.s32.totalorder %s15, 1
    %p78 = por %p76, %p77
    %p80 = scmp.ne.s32.totalorder %s63, %s79
    %p81 = scmp.eq.s32.totalorder %s15, 0
    %p82 = por %p80, %p81
    %s84 = sadd.s32 %s83, 1
    %p87 = scmp.eq.s32.totalorder %s9, 1
    %p88 = scmp.ne.s32.totalorder %s83, %s85
    %p89 = scmp.eq.s32.totalorder %s9, 0
    %p90 = por %p88, %p89
    %p91 = scmp.ne.s32.totalorder %s83, %s85
    %p92 = scmp.eq.s32.totalorder %s14, 1
    %p93 = por %p91, %p92
    %p94 = scmp.ne.s32.totalorder %s85, %s86
    %p95 = scmp.eq.s32.totalorder %s14, 0
    %p96 = por %p94, %p95
    %p97 = scmp.ne.s32.totalorder %s85, %s86
    %p98 = scmp.eq.s32.totalorder %s15, 1
    %p99 = por %p97, %p98
    %p101 = scmp.ne.s32.totalorder %s86, %s100
    %p102 = scmp.eq.s32.totalorder %s15, 0
    %p103 = por %p101, %p102
    %s104 = ssub.s32 %s16, %s28
    %p105 = scmp.eq.s32.totalorder %s104, 0
    %s107 = sadd.s32 %s106, 1
    %s108 = scalar_select %p105, %s106, %s107
    %p111 = pneg %p105
    %p112 = scmp.eq.s32.totalorder %s9, 1
    %p113 = por %p111, %p112
    %p114 = scmp.ne.s32.totalorder %s106, %s109
    %p115 = scmp.eq.s32.totalorder %s9, 0
    %p116 = por %p114, %p115
    %p117 = scmp.ne.s32.totalorder %s106, %s109
    %p118 = scmp.eq.s32.totalorder %s14, 1
    %p119 = por %p117, %p118
    %p120 = scmp.ne.s32.totalorder %s109, %s110
    %p121 = scmp.eq.s32.totalorder %s14, 0
    %p122 = por %p120, %p121
    %p123 = scmp.ne.s32.totalorder %s109, %s110
    %p124 = scmp.eq.s32.totalorder %s15, 1
    %p125 = por %p123, %p124
    %p127 = scmp.ne.s32.totalorder %s110, %s126
    %p128 = scmp.eq.s32.totalorder %s15, 0
    %p129 = por %p127, %p128
    %p130 = scmp.le.s32.totalorder 1, %s9
    %p131 = scmp.lt.s32.totalorder %s9, 3
    %p132 = pnand %p130, %p131
    %p133 = pneg %p132
    // Predicated region
    $region9: #{mfm_group_forward.3} parent=5 // pred_check
      _
    $region10: #{mfm_group_forward.3} parent=5 // pred_check_branch
      %135 = sbr.rel (%p132) target = $region12
    $region11: #{mfm_group_forward.3} parent=5 // pred_region
      %s136 = ssub.s32 %s9, 1
      // Predicated region
      $region13: #{mfm_group_forward.3} parent=11 // pred_check
        %p137 = pneg %p75
      $region14: #{mfm_group_forward.3} parent=11 // pred_check_branch
        %139 = sbr.rel (%p137) target = $region16
      $region15: #{mfm_group_forward.3} parent=11 // pred_region
        %s140 = smul.u32 5, %s19
        %p141 = scmp.lt.s32.totalorder %s140, 4
        %s142 = scalar_select %p141, %s140, 4
        %s143 = smul.addr %s142, 2
        %s144 = smul.addr %s143, 4
        %s145 = scalar_lea.vmem %s1, %s144
        %s146 = smul.u32 5, %s19
      $region16: #{mfm_group_forward.3} parent=11 // pred_fallthru
        _
      // Predicated region
      $region17: #{mfm_group_forward.3} parent=11 // pred_check
        %p147 = pneg %p96
      $region18: #{mfm_group_forward.3} parent=11 // pred_check_branch
        %149 = sbr.rel (%p147) target = $region20
      $region19: #{mfm_group_forward.3} parent=11 // pred_region
        _
      $region20: #{mfm_group_forward.3} parent=11 // pred_fallthru
        _
    $region12: #{mfm_group_forward.3} parent=5 // pred_fallthru
      _
    %p150 = scmp.lt.s32.totalorder %s9, 2
    // Predicated region
    $region21: #{mfm_group_forward.3} parent=5 // pred_check
      %p151 = pneg %p150
    $region22: #{mfm_group_forward.3} parent=5 // pred_check_branch
      %153 = sbr.rel (%p151) target = $region24
    $region23: #{mfm_group_forward.3} parent=5 // pred_region
      // Predicated region
      $region25: #{mfm_group_forward.3} parent=23 // pred_check
        %p154 = pneg %p43
      $region26: #{mfm_group_forward.3} parent=23 // pred_check_branch
        %156 = sbr.rel (%p154) target = $region28
      $region27: #{mfm_group_forward.3} parent=23 // pred_region
        %s157 = smul.u32 32, %s16
        %p158 = scmp.lt.s32.totalorder %s157, 63
        %s159 = scalar_select %p158, %s157, 63
        %p160 = scmp.lt.s32.totalorder %s17, 0
        %s161 = scalar_select %p160, %s17, 0
        %s162 = sadd.s32 %s161, %s159
        %s163 = smul.addr %s162, 4
        %s164 = scalar_lea.vmem %s0, %s163
        %s165 = smul.u32 32, %s16
      $region28: #{mfm_group_forward.3} parent=23 // pred_fallthru
        _
    $region24: #{mfm_group_forward.3} parent=5 // pred_fallthru
      _
    %p166 = scmp.le.s32.totalorder 1, %s9
    %p167 = scmp.lt.s32.totalorder %s9, 3
    %p168 = pnand %p166, %p167
    %p169 = pneg %p168
    // Predicated region
    $region29: #{mfm_group_forward.3} parent=5 // pred_check
      _
    $region30: #{mfm_group_forward.3} parent=5 // pred_check_branch
      %171 = sbr.rel (%p168) target = $region32
    $region31: #{mfm_group_forward.3} parent=5 // pred_region
      %s172 = ssub.s32 %s9, 1
      %s173 = smul.u32 32, %s18
      %p174 = scmp.lt.s32.totalorder %s173, 63
      %s175 = scalar_select %p174, %s173, 63
      %p176 = scmp.lt.s32.totalorder %s19, 0
      %s177 = scalar_select %p176, %s19, 0
      %s178 = sadd.s32 %s177, %s175
      %s179 = smul.addr %s178, 4
      %s180 = scalar_lea.vmem %s0, %s179
      %p181 = pneg %p49
      %p182 = pneg %p46
      %s183 = smul.u32 5, %s19
      %p184 = scmp.lt.s32.totalorder %s183, 4
      %s185 = scalar_select %p184, %s183, 4
      %s186 = smul.addr %s185, 2
      %s187 = smul.addr %s186, 4
      %s188 = scalar_lea.vmem %s1, %s187
      %p189 = pneg %p75
      %p190 = pneg %p72
      %p191 = pneg %p96
      %p192 = pneg %p93
      %p193 = pneg %p122
      %p194 = pneg %p119
      %s195 = smul.u32 32, %s18
      %p196 = scmp.lt.s32.totalorder %s195, 63
      %s197 = scalar_select %p196, %s195, 63
      %s198 = smul.addr %s197, 8
      %s199 = scalar_lea.vmem %s3, %s198
      %s200 = smul.u32 32, %s18
      %p201 = scmp.lt.s32.totalorder %s200, 63
      %s202 = scalar_select %p201, %s200, 63
      %p203 = scmp.lt.s32.totalorder %s19, 0
      %s204 = scalar_select %p203, %s19, 0
      %s205 = sadd.s32 %s204, %s202
      %s206 = smul.addr %s205, 4
      %s207 = scalar_lea.vmem %s0, %s206
      %s208 = smul.u32 32, %s18
      %s209 = smul.u32 5, %s19
      %p210 = scmp.lt.s32.totalorder %s209, 4
      %s211 = scalar_select %p210, %s209, 4
      %s212 = smul.addr %s211, 2
      %s213 = smul.addr %s212, 4
      %s214 = scalar_lea.vmem %s1, %s213
      %s215 = smul.u32 5, %s19
      %s216 = smul.u32 32, %s18
      %p217 = scmp.lt.s32.totalorder %s216, 63
      %s218 = scalar_select %p217, %s216, 63
      %s219 = smul.addr %s218, 8
      %s220 = scalar_lea.vmem %s3, %s219
      %s221 = smul.u32 32, %s18
      %p223 = scmp.eq.s32.totalorder %s19, 0
      // Predicated region
      $region33: #{mfm_group_forward.3} parent=31 // pred_check
        %p224 = pneg %p223
      $region34: #{mfm_group_forward.3} parent=31 // pred_check_branch
        %226 = sbr.rel (%p224) target = $region36
      $region35: #{mfm_group_forward.3} parent=31 // pred_region
        %227 = vst [vmem:[#allocation2] sm:$0xff] 0.0
        %228 = vst [vmem:[#allocation2 + $0x8] sm:$0xff] 0.0
        %229 = vst [vmem:[#allocation2 + $0x10] sm:$0xff] 0.0
        %230 = vst [vmem:[#allocation2 + $0x18] sm:$0xff] 0.0
        %231 = vst [vmem:[#allocation2 + $0x20] sm:$0xff] 0.0
        %232 = vst [vmem:[#allocation2 + $0x28] sm:$0xff] 0.0
        %233 = vst [vmem:[#allocation2 + $0x30] sm:$0xff] 0.0
        %234 = vst [vmem:[#allocation2 + $0x38] sm:$0xff] 0.0
        %235 = vst [vmem:[#allocation2 + $0x40] sm:$0xff] 0.0
        %236 = vst [vmem:[#allocation2 + $0x48] sm:$0xff] 0.0
        %237 = vst [vmem:[#allocation2 + $0x50] sm:$0xff] 0.0
        %238 = vst [vmem:[#allocation2 + $0x58] sm:$0xff] 0.0
        %239 = vst [vmem:[#allocation2 + $0x60] sm:$0xff] 0.0
        %240 = vst [vmem:[#allocation2 + $0x68] sm:$0xff] 0.0
        %241 = vst [vmem:[#allocation2 + $0x70] sm:$0xff] 0.0
        %242 = vst [vmem:[#allocation2 + $0x78] sm:$0xff] 0.0
        %243 = vst [vmem:[#allocation2 + $0x80] sm:$0xff] 0.0
        %244 = vst [vmem:[#allocation2 + $0x88] sm:$0xff] 0.0
        %245 = vst [vmem:[#allocation2 + $0x90] sm:$0xff] 0.0
        %246 = vst [vmem:[#allocation2 + $0x98] sm:$0xff] 0.0
        %247 = vst [vmem:[#allocation2 + $0xa0] sm:$0xff] 0.0
        %248 = vst [vmem:[#allocation2 + $0xa8] sm:$0xff] 0.0
        %249 = vst [vmem:[#allocation2 + $0xb0] sm:$0xff] 0.0
        %250 = vst [vmem:[#allocation2 + $0xb8] sm:$0xff] 0.0
        %251 = vst [vmem:[#allocation2 + $0xc0] sm:$0xff] 0.0
        %252 = vst [vmem:[#allocation2 + $0xc8] sm:$0xff] 0.0
        %253 = vst [vmem:[#allocation2 + $0xd0] sm:$0xff] 0.0
        %254 = vst [vmem:[#allocation2 + $0xd8] sm:$0xff] 0.0
        %255 = vst [vmem:[#allocation2 + $0xe0] sm:$0xff] 0.0
        %256 = vst [vmem:[#allocation2 + $0xe8] sm:$0xff] 0.0
        %257 = vst [vmem:[#allocation2 + $0xf0] sm:$0xff] 0.0
        %258 = vst [vmem:[#allocation2 + $0xf8] sm:$0xff] 0.0
        %259 = vst [vmem:[#allocation2 + $0x100] sm:$0xff] 0.0
        %260 = vst [vmem:[#allocation2 + $0x108] sm:$0xff] 0.0
        %261 = vst [vmem:[#allocation2 + $0x110] sm:$0xff] 0.0
        %262 = vst [vmem:[#allocation2 + $0x118] sm:$0xff] 0.0
        %263 = vst [vmem:[#allocation2 + $0x120] sm:$0xff] 0.0
        %264 = vst [vmem:[#allocation2 + $0x128] sm:$0xff] 0.0
        %265 = vst [vmem:[#allocation2 + $0x130] sm:$0xff] 0.0
        %266 = vst [vmem:[#allocation2 + $0x138] sm:$0xff] 0.0
        %267 = vst [vmem:[#allocation2 + $0x140] sm:$0xff] 0.0
        %268 = vst [vmem:[#allocation2 + $0x148] sm:$0xff] 0.0
        %269 = vst [vmem:[#allocation2 + $0x150] sm:$0xff] 0.0
        %270 = vst [vmem:[#allocation2 + $0x158] sm:$0xff] 0.0
        %271 = vst [vmem:[#allocation2 + $0x160] sm:$0xff] 0.0
        %272 = vst [vmem:[#allocation2 + $0x168] sm:$0xff] 0.0
        %273 = vst [vmem:[#allocation2 + $0x170] sm:$0xff] 0.0
        %274 = vst [vmem:[#allocation2 + $0x178] sm:$0xff] 0.0
        %275 = vst [vmem:[#allocation2 + $0x180] sm:$0xff] 0.0
        %276 = vst [vmem:[#allocation2 + $0x188] sm:$0xff] 0.0
        %277 = vst [vmem:[#allocation2 + $0x190] sm:$0xff] 0.0
        %278 = vst [vmem:[#allocation2 + $0x198] sm:$0xff] 0.0
        %279 = vst [vmem:[#allocation2 + $0x1a0] sm:$0xff] 0.0
        %280 = vst [vmem:[#allocation2 + $0x1a8] sm:$0xff] 0.0
        %281 = vst [vmem:[#allocation2 + $0x1b0] sm:$0xff] 0.0
        %282 = vst [vmem:[#allocation2 + $0x1b8] sm:$0xff] 0.0
        %283 = vst [vmem:[#allocation2 + $0x1c0] sm:$0xff] 0.0
        %284 = vst [vmem:[#allocation2 + $0x1c8] sm:$0xff] 0.0
        %285 = vst [vmem:[#allocation2 + $0x1d0] sm:$0xff] 0.0
        %286 = vst [vmem:[#allocation2 + $0x1d8] sm:$0xff] 0.0
        %287 = vst [vmem:[#allocation2 + $0x1e0] sm:$0xff] 0.0
        %288 = vst [vmem:[#allocation2 + $0x1e8] sm:$0xff] 0.0
        %289 = vst [vmem:[#allocation2 + $0x1f0] sm:$0xff] 0.0
        %290 = vst [vmem:[#allocation2 + $0x1f8] sm:$0xff] 0.0
      $region36: #{mfm_group_forward.3} parent=31 // pred_fallthru
        _
      %v291 = vld [vmem:[#allocation2] sm:$0xff]
      %v292 = vld [vmem:[#allocation2 + $0x8] sm:$0xff]
      %v293 = vld [vmem:[#allocation2 + $0x10] sm:$0xff]
      %v294 = vld [vmem:[#allocation2 + $0x18] sm:$0xff]
      %v295 = vld [vmem:[#allocation2 + $0x20] sm:$0xff]
      %v296 = vld [vmem:[#allocation2 + $0x28] sm:$0xff]
      %v297 = vld [vmem:[#allocation2 + $0x30] sm:$0xff]
      %v298 = vld [vmem:[#allocation2 + $0x38] sm:$0xff]
      %v299 = vld [vmem:[#allocation2 + $0x40] sm:$0xff]
      %v300 = vld [vmem:[#allocation2 + $0x48] sm:$0xff]
      %v301 = vld [vmem:[#allocation2 + $0x50] sm:$0xff]
      %v302 = vld [vmem:[#allocation2 + $0x58] sm:$0xff]
      %v303 = vld [vmem:[#allocation2 + $0x60] sm:$0xff]
      %v304 = vld [vmem:[#allocation2 + $0x68] sm:$0xff]
      %v305 = vld [vmem:[#allocation2 + $0x70] sm:$0xff]
      %v306 = vld [vmem:[#allocation2 + $0x78] sm:$0xff]
      %v307 = vld [vmem:[#allocation2 + $0x80] sm:$0xff]
      %v308 = vld [vmem:[#allocation2 + $0x88] sm:$0xff]
      %v309 = vld [vmem:[#allocation2 + $0x90] sm:$0xff]
      %v310 = vld [vmem:[#allocation2 + $0x98] sm:$0xff]
      %v311 = vld [vmem:[#allocation2 + $0xa0] sm:$0xff]
      %v312 = vld [vmem:[#allocation2 + $0xa8] sm:$0xff]
      %v313 = vld [vmem:[#allocation2 + $0xb0] sm:$0xff]
      %v314 = vld [vmem:[#allocation2 + $0xb8] sm:$0xff]
      %v315 = vld [vmem:[#allocation2 + $0xc0] sm:$0xff]
      %v316 = vld [vmem:[#allocation2 + $0xc8] sm:$0xff]
      %v317 = vld [vmem:[#allocation2 + $0xd0] sm:$0xff]
      %v318 = vld [vmem:[#allocation2 + $0xd8] sm:$0xff]
      %v319 = vld [vmem:[#allocation2 + $0xe0] sm:$0xff]
      %v320 = vld [vmem:[#allocation2 + $0xe8] sm:$0xff]
      %v321 = vld [vmem:[#allocation2 + $0xf0] sm:$0xff]
      %v322 = vld [vmem:[#allocation2 + $0xf8] sm:$0xff]
      %v323 = vld [vmem:[#allocation2 + $0x100] sm:$0xff]
      %v324 = vld [vmem:[#allocation2 + $0x108] sm:$0xff]
      %v325 = vld [vmem:[#allocation2 + $0x110] sm:$0xff]
      %v326 = vld [vmem:[#allocation2 + $0x118] sm:$0xff]
      %v327 = vld [vmem:[#allocation2 + $0x120] sm:$0xff]
      %v328 = vld [vmem:[#allocation2 + $0x128] sm:$0xff]
      %v329 = vld [vmem:[#allocation2 + $0x130] sm:$0xff]
      %v330 = vld [vmem:[#allocation2 + $0x138] sm:$0xff]
      %v331 = vld [vmem:[#allocation2 + $0x140] sm:$0xff]
      %v332 = vld [vmem:[#allocation2 + $0x148] sm:$0xff]
      %v333 = vld [vmem:[#allocation2 + $0x150] sm:$0xff]
      %v334 = vld [vmem:[#allocation2 + $0x158] sm:$0xff]
      %v335 = vld [vmem:[#allocation2 + $0x160] sm:$0xff]
      %v336 = vld [vmem:[#allocation2 + $0x168] sm:$0xff]
      %v337 = vld [vmem:[#allocation2 + $0x170] sm:$0xff]
      %v338 = vld [vmem:[#allocation2 + $0x178] sm:$0xff]
      %v339 = vld [vmem:[#allocation2 + $0x180] sm:$0xff]
      %v340 = vld [vmem:[#allocation2 + $0x188] sm:$0xff]
      %v341 = vld [vmem:[#allocation2 + $0x190] sm:$0xff]
      %v342 = vld [vmem:[#allocation2 + $0x198] sm:$0xff]
      %v343 = vld [vmem:[#allocation2 + $0x1a0] sm:$0xff]
      %v344 = vld [vmem:[#allocation2 + $0x1a8] sm:$0xff]
      %v345 = vld [vmem:[#allocation2 + $0x1b0] sm:$0xff]
      %v346 = vld [vmem:[#allocation2 + $0x1b8] sm:$0xff]
      %v347 = vld [vmem:[#allocation2 + $0x1c0] sm:$0xff]
      %v348 = vld [vmem:[#allocation2 + $0x1c8] sm:$0xff]
      %v349 = vld [vmem:[#allocation2 + $0x1d0] sm:$0xff]
      %v350 = vld [vmem:[#allocation2 + $0x1d8] sm:$0xff]
      %v351 = vld [vmem:[#allocation2 + $0x1e0] sm:$0xff]
      %v352 = vld [vmem:[#allocation2 + $0x1e8] sm:$0xff]
      %v353 = vld [vmem:[#allocation2 + $0x1f0] sm:$0xff]
      %v354 = vld [vmem:[#allocation2 + $0x1f8] sm:$0xff]
      %v355 = vld [vmem:[%s207] sm:$0xf]
      %v356 = vld [vmem:[%s207 + $0x4] sm:$0xf]
      %v357 = vld [vmem:[%s207 + $0x8] sm:$0xf]
      %v358 = vld [vmem:[%s207 + $0xc] sm:$0xf]
      %v359 = vld [vmem:[%s207 + $0x10] sm:$0xf]
      %v360 = vld [vmem:[%s207 + $0x14] sm:$0xf]
      %v361 = vld [vmem:[%s207 + $0x18] sm:$0xf]
      %v362 = vld [vmem:[%s207 + $0x1c] sm:$0xf]
      %v363 = vld [vmem:[%s207 + $0x20] sm:$0xf]
      %v364 = vld [vmem:[%s207 + $0x24] sm:$0xf]
      %v365 = vld [vmem:[%s207 + $0x28] sm:$0xf]
      %v366 = vld [vmem:[%s207 + $0x2c] sm:$0xf]
      %v367 = vld [vmem:[%s207 + $0x30] sm:$0xf]
      %v368 = vld [vmem:[%s207 + $0x34] sm:$0xf]
      %v369 = vld [vmem:[%s207 + $0x38] sm:$0xf]
      %v370 = vld [vmem:[%s207 + $0x3c] sm:$0xf]
      %v371 = vld [vmem:[%s207 + $0x40] sm:$0xf]
      %v372 = vld [vmem:[%s207 + $0x44] sm:$0xf]
      %v373 = vld [vmem:[%s207 + $0x48] sm:$0xf]
      %v374 = vld [vmem:[%s207 + $0x4c] sm:$0xf]
      %v375 = vld [vmem:[%s207 + $0x50] sm:$0xf]
      %v376 = vld [vmem:[%s207 + $0x54] sm:$0xf]
      %v377 = vld [vmem:[%s207 + $0x58] sm:$0xf]
      %v378 = vld [vmem:[%s207 + $0x5c] sm:$0xf]
      %v379 = vld [vmem:[%s207 + $0x60] sm:$0xf]
      %v380 = vld [vmem:[%s207 + $0x64] sm:$0xf]
      %v381 = vld [vmem:[%s207 + $0x68] sm:$0xf]
      %v382 = vld [vmem:[%s207 + $0x6c] sm:$0xf]
      %v383 = vld [vmem:[%s207 + $0x70] sm:$0xf]
      %v384 = vld [vmem:[%s207 + $0x74] sm:$0xf]
      %v385 = vld [vmem:[%s207 + $0x78] sm:$0xf]
      %v386 = vld [vmem:[%s207 + $0x7c] sm:$0xf]
      %v387 = vld [vmem:[%s214] sm:$0xff]
      %v388 = vld [vmem:[%s214 + $0x8] sm:$0xff]
      %v389 = vld [vmem:[%s214 + $0x10] sm:$0xff]
      %v390 = vld [vmem:[%s214 + $0x18] sm:$0xff]
      %v391 = vld [vmem:[%s214 + $0x20] sm:$0xff]
      %v424 = vunpack.c.l.b16 %v355
      %v425 = vunpack.c.l.b16 %v356
      %v426 = vunpack.c.l.b16 %v357
      %v427 = vunpack.c.l.b16 %v358
      %v428 = vunpack.c.l.b16 %v359
      %v429 = vunpack.c.l.b16 %v360
      %v430 = vunpack.c.l.b16 %v361
      %v431 = vunpack.c.l.b16 %v362
      %v432 = vunpack.c.l.b16 %v363
      %v433 = vunpack.c.l.b16 %v364
      %v434 = vunpack.c.l.b16 %v365
      %v435 = vunpack.c.l.b16 %v366
      %v436 = vunpack.c.l.b16 %v367
      %v437 = vunpack.c.l.b16 %v368
      %v438 = vunpack.c.l.b16 %v369
      %v439 = vunpack.c.l.b16 %v370
      %v440 = vunpack.c.l.b16 %v371
      %v441 = vunpack.c.l.b16 %v372
      %v442 = vunpack.c.l.b16 %v373
      %v443 = vunpack.c.l.b16 %v374
      %v444 = vunpack.c.l.b16 %v375
      %v445 = vunpack.c.l.b16 %v376
      %v446 = vunpack.c.l.b16 %v377
      %v447 = vunpack.c.l.b16 %v378
      %v448 = vunpack.c.l.b16 %v379
      %v449 = vunpack.c.l.b16 %v380
      %v450 = vunpack.c.l.b16 %v381
      %v451 = vunpack.c.l.b16 %v382
      %v452 = vunpack.c.l.b16 %v383
      %v453 = vunpack.c.l.b16 %v384
      %v454 = vunpack.c.l.b16 %v385
      %v455 = vunpack.c.l.b16 %v386
      %v456 = vpack.c.b16 %v425, %v424
      %v457 = vpack.c.b16 %v427, %v426
      %v458 = vpack.c.b16 %v429, %v428
      %v459 = vpack.c.b16 %v431, %v430
      %v460 = vpack.c.b16 %v433, %v432
      %v461 = vpack.c.b16 %v435, %v434
      %v462 = vpack.c.b16 %v437, %v436
      %v463 = vpack.c.b16 %v439, %v438
      %v464 = vpack.c.b16 %v441, %v440
      %v465 = vpack.c.b16 %v443, %v442
      %v466 = vpack.c.b16 %v445, %v444
      %v467 = vpack.c.b16 %v447, %v446
      %v468 = vpack.c.b16 %v449, %v448
      %v469 = vpack.c.b16 %v451, %v450
      %v470 = vpack.c.b16 %v453, %v452
      %v471 = vpack.c.b16 %v455, %v454
      %v477 = vunpack.c.l.b16 %v387
      %v478 = vunpack.c.h.b16 %v387
      %v479 = vunpack.c.l.b16 %v388
      %v480 = vunpack.c.h.b16 %v388
      %v481 = vunpack.c.l.b16 %v389
      %v482 = vunpack.c.h.b16 %v389
      %v483 = vunpack.c.l.b16 %v390
      %v484 = vunpack.c.h.b16 %v390
      %v485 = vunpack.c.l.b16 %v391
      %v486 = vunpack.c.h.b16 %v391
      %v487 = vpack.c.b16 %v479, %v477
      %v488 = vpack.c.b16 %v480, %v478
      %v489 = vpack.c.b16 %v483, %v481
      %v490 = vpack.c.b16 %v484, %v482
      %v491 = vpack.c.b16 %v485, %v485
      %v492 = vpack.c.b16 %v486, %v486
      %vm497 = vcmask 326656
      %v499 = vsel %vm497, %v456, 0
      %v502 = vsel %vm497, %v457, 0
      %v505 = vsel %vm497, %v458, 0
      %v508 = vsel %vm497, %v459, 0
      %v511 = vsel %vm497, %v460, 0
      %v514 = vsel %vm497, %v461, 0
      %v517 = vsel %vm497, %v462, 0
      %v520 = vsel %vm497, %v463, 0
      %v523 = vsel %vm497, %v464, 0
      %v526 = vsel %vm497, %v465, 0
      %v529 = vsel %vm497, %v466, 0
      %v532 = vsel %vm497, %v467, 0
      %v535 = vsel %vm497, %v468, 0
      %v538 = vsel %vm497, %v469, 0
      %v541 = vsel %vm497, %v470, 0
      %v544 = vsel %vm497, %v471, 0
      %vm546 = vcmask 1043456
      %v548 = vsel %vm546, %v491, 0
      %v551 = vsel %vm546, %v492, 0
      %553 = vmatprep.subr.bf16.mxu0 0
      %554 = vmatpush1.bf16.msra.mxu0 0
      %555 = vmatprep.subr.bf16.mxu0 0
      %556 = vmatpush1.bf16.msra.mxu0 0
      %557 = vmatprep.subr.bf16.mxu0 0
      %558 = vmatpush1.bf16.msra.mxu0 0
      %559 = vmatprep.subr.bf16.mxu0 0
      %560 = vmatpush1.bf16.msra.mxu0 0
      %561 = vmatprep.subr.bf16.mxu0 0
      %562 = vmatpush1.bf16.msra.mxu0 0
      %563 = vmatprep.subr.bf16.mxu0 %v551
      %564 = vmatpush1.bf16.msra.mxu0 %v548
      %565 = vmatprep.subr.bf16.mxu0 %v490
      %566 = vmatpush1.bf16.msra.mxu0 %v489
      %567 = vmatprep.subr.bf16.mxu0 %v488
      %568 = vmatpush1.bf16.msra.mxu0 %v487
      %569 = vmatprep.subr.bf16.mxu0 0
      %570 = vmatpush2.bf16.msra.mxu0 0
      %571 = vmatprep.subr.bf16.mxu0 0
      %572 = vmatpush2.bf16.msra.mxu0 0
      %573 = vmatprep.subr.bf16.mxu0 0
      %574 = vmatpush2.bf16.msra.mxu0 0
      %575 = vmatprep.subr.bf16.mxu0 0
      %576 = vmatpush2.bf16.msra.mxu0 0
      %577 = vmatprep.subr.bf16.mxu0 0
      %578 = vmatpush2.bf16.msra.mxu0 0
      %579 = vmatprep.subr.bf16.mxu0 0
      %580 = vmatpush2.bf16.msra.mxu0 0
      %581 = vmatprep.subr.bf16.mxu0 0
      %582 = vmatpush2.bf16.msra.mxu0 0
      %583 = vmatprep.subr.bf16.mxu0 0
      %584 = vmatpush2.bf16.msra.mxu0 0
      %585 = vmatprep.mubr.bf16.mxu0 0
      %586 = vmatmul.mubr.bf16.gmra.mxu0 %v499
      %v587 = vpop.f32.mrf.mxu0
      %v588 = vadd.f32 0.0, %v587
      %v589 = vpop.f32.mrf.mxu0
      %v590 = vadd.f32 0.0, %v589
      %v591 = vpop.f32.mrf.mxu0
      %v592 = vadd.f32 0.0, %v591
      %v593 = vpop.f32.mrf.mxu0
      %v594 = vadd.f32 0.0, %v593
      %595 = vmatprep.mubr.bf16.mxu0 0
      %596 = vmatmul.mubr.bf16.gmra.mxu0 %v502
      %v597 = vpop.f32.mrf.mxu0
      %v598 = vadd.f32 0.0, %v597
      %v599 = vpop.f32.mrf.mxu0
      %v600 = vadd.f32 0.0, %v599
      %v601 = vpop.f32.mrf.mxu0
      %v602 = vadd.f32 0.0, %v601
      %v603 = vpop.f32.mrf.mxu0
      %v604 = vadd.f32 0.0, %v603
      %605 = vmatprep.mubr.bf16.mxu0 0
      %606 = vmatmul.mubr.bf16.gmra.mxu0 %v505
      %v607 = vpop.f32.mrf.mxu0
      %v608 = vadd.f32 0.0, %v607
      %v609 = vpop.f32.mrf.mxu0
      %v610 = vadd.f32 0.0, %v609
      %v611 = vpop.f32.mrf.mxu0
      %v612 = vadd.f32 0.0, %v611
      %v613 = vpop.f32.mrf.mxu0
      %v614 = vadd.f32 0.0, %v613
      %615 = vmatprep.mubr.bf16.mxu0 0
      %616 = vmatmul.mubr.bf16.gmra.mxu0 %v508
      %v617 = vpop.f32.mrf.mxu0
      %v618 = vadd.f32 0.0, %v617
      %v619 = vpop.f32.mrf.mxu0
      %v620 = vadd.f32 0.0, %v619
      %v621 = vpop.f32.mrf.mxu0
      %v622 = vadd.f32 0.0, %v621
      %v623 = vpop.f32.mrf.mxu0
      %v624 = vadd.f32 0.0, %v623
      %625 = vmatprep.mubr.bf16.mxu0 0
      %626 = vmatmul.mubr.bf16.gmra.mxu0 %v511
      %v627 = vpop.f32.mrf.mxu0
      %v628 = vadd.f32 0.0, %v627
      %v629 = vpop.f32.mrf.mxu0
      %v630 = vadd.f32 0.0, %v629
      %v631 = vpop.f32.mrf.mxu0
      %v632 = vadd.f32 0.0, %v631
      %v633 = vpop.f32.mrf.mxu0
      %v634 = vadd.f32 0.0, %v633
      %635 = vmatprep.mubr.bf16.mxu0 0
      %636 = vmatmul.mubr.bf16.gmra.mxu0 %v514
      %v637 = vpop.f32.mrf.mxu0
      %v638 = vadd.f32 0.0, %v637
      %v639 = vpop.f32.mrf.mxu0
      %v640 = vadd.f32 0.0, %v639
      %v641 = vpop.f32.mrf.mxu0
      %v642 = vadd.f32 0.0, %v641
      %v643 = vpop.f32.mrf.mxu0
      %v644 = vadd.f32 0.0, %v643
      %645 = vmatprep.mubr.bf16.mxu0 0
      %646 = vmatmul.mubr.bf16.gmra.mxu0 %v517
      %v647 = vpop.f32.mrf.mxu0
      %v648 = vadd.f32 0.0, %v647
      %v649 = vpop.f32.mrf.mxu0
      %v650 = vadd.f32 0.0, %v649
      %v651 = vpop.f32.mrf.mxu0
      %v652 = vadd.f32 0.0, %v651
      %v653 = vpop.f32.mrf.mxu0
      %v654 = vadd.f32 0.0, %v653
      %655 = vmatprep.mubr.bf16.mxu0 0
      %656 = vmatmul.mubr.bf16.gmra.mxu0 %v520
      %v657 = vpop.f32.mrf.mxu0
      %v658 = vadd.f32 0.0, %v657
      %v659 = vpop.f32.mrf.mxu0
      %v660 = vadd.f32 0.0, %v659
      %v661 = vpop.f32.mrf.mxu0
      %v662 = vadd.f32 0.0, %v661
      %v663 = vpop.f32.mrf.mxu0
      %v664 = vadd.f32 0.0, %v663
      %665 = vmatprep.mubr.bf16.mxu0 0
      %666 = vmatmul.mubr.bf16.gmra.mxu0 %v523
      %v667 = vpop.f32.mrf.mxu0
      %v668 = vadd.f32 0.0, %v667
      %v669 = vpop.f32.mrf.mxu0
      %v670 = vadd.f32 0.0, %v669
      %v671 = vpop.f32.mrf.mxu0
      %v672 = vadd.f32 0.0, %v671
      %v673 = vpop.f32.mrf.mxu0
      %v674 = vadd.f32 0.0, %v673
      %675 = vmatprep.mubr.bf16.mxu0 0
      %676 = vmatmul.mubr.bf16.gmra.mxu0 %v526
      %v677 = vpop.f32.mrf.mxu0
      %v678 = vadd.f32 0.0, %v677
      %v679 = vpop.f32.mrf.mxu0
      %v680 = vadd.f32 0.0, %v679
      %v681 = vpop.f32.mrf.mxu0
      %v682 = vadd.f32 0.0, %v681
      %v683 = vpop.f32.mrf.mxu0
      %v684 = vadd.f32 0.0, %v683
      %685 = vmatprep.mubr.bf16.mxu0 0
      %686 = vmatmul.mubr.bf16.gmra.mxu0 %v529
      %v687 = vpop.f32.mrf.mxu0
      %v688 = vadd.f32 0.0, %v687
      %v689 = vpop.f32.mrf.mxu0
      %v690 = vadd.f32 0.0, %v689
      %v691 = vpop.f32.mrf.mxu0
      %v692 = vadd.f32 0.0, %v691
      %v693 = vpop.f32.mrf.mxu0
      %v694 = vadd.f32 0.0, %v693
      %695 = vmatprep.mubr.bf16.mxu0 0
      %696 = vmatmul.mubr.bf16.gmra.mxu0 %v532
      %v697 = vpop.f32.mrf.mxu0
      %v698 = vadd.f32 0.0, %v697
      %v699 = vpop.f32.mrf.mxu0
      %v700 = vadd.f32 0.0, %v699
      %v701 = vpop.f32.mrf.mxu0
      %v702 = vadd.f32 0.0, %v701
      %v703 = vpop.f32.mrf.mxu0
      %v704 = vadd.f32 0.0, %v703
      %705 = vmatprep.mubr.bf16.mxu0 0
      %706 = vmatmul.mubr.bf16.gmra.mxu0 %v535
      %v707 = vpop.f32.mrf.mxu0
      %v708 = vadd.f32 0.0, %v707
      %v709 = vpop.f32.mrf.mxu0
      %v710 = vadd.f32 0.0, %v709
      %v711 = vpop.f32.mrf.mxu0
      %v712 = vadd.f32 0.0, %v711
      %v713 = vpop.f32.mrf.mxu0
      %v714 = vadd.f32 0.0, %v713
      %715 = vmatprep.mubr.bf16.mxu0 0
      %716 = vmatmul.mubr.bf16.gmra.mxu0 %v538
      %v717 = vpop.f32.mrf.mxu0
      %v718 = vadd.f32 0.0, %v717
      %v719 = vpop.f32.mrf.mxu0
      %v720 = vadd.f32 0.0, %v719
      %v721 = vpop.f32.mrf.mxu0
      %v722 = vadd.f32 0.0, %v721
      %v723 = vpop.f32.mrf.mxu0
      %v724 = vadd.f32 0.0, %v723
      %725 = vmatprep.mubr.bf16.mxu0 0
      %726 = vmatmul.mubr.bf16.gmra.mxu0 %v541
      %v727 = vpop.f32.mrf.mxu0
      %v728 = vadd.f32 0.0, %v727
      %v729 = vpop.f32.mrf.mxu0
      %v730 = vadd.f32 0.0, %v729
      %v731 = vpop.f32.mrf.mxu0
      %v732 = vadd.f32 0.0, %v731
      %v733 = vpop.f32.mrf.mxu0
      %v734 = vadd.f32 0.0, %v733
      %735 = vmatprep.mubr.bf16.mxu0 0
      %736 = vmatmul.mubr.bf16.gmra.mxu0 %v544
      %v737 = vpop.f32.mrf.mxu0
      %v738 = vadd.f32 0.0, %v737
      %v739 = vpop.f32.mrf.mxu0
      %v740 = vadd.f32 0.0, %v739
      %v741 = vpop.f32.mrf.mxu0
      %v742 = vadd.f32 0.0, %v741
      %v743 = vpop.f32.mrf.mxu0
      %v744 = vadd.f32 0.0, %v743
      %745 = vdwg.mxu0
      %v746 = vadd.f32 %v291, %v588
      %v747 = vadd.f32 %v292, %v590
      %v748 = vadd.f32 %v293, %v592
      %v749 = vadd.f32 %v294, %v594
      %v750 = vadd.f32 %v295, %v598
      %v751 = vadd.f32 %v296, %v600
      %v752 = vadd.f32 %v297, %v602
      %v753 = vadd.f32 %v298, %v604
      %v754 = vadd.f32 %v299, %v608
      %v755 = vadd.f32 %v300, %v610
      %v756 = vadd.f32 %v301, %v612
      %v757 = vadd.f32 %v302, %v614
      %v758 = vadd.f32 %v303, %v618
      %v759 = vadd.f32 %v304, %v620
      %v760 = vadd.f32 %v305, %v622
      %v761 = vadd.f32 %v306, %v624
      %v762 = vadd.f32 %v307, %v628
      %v763 = vadd.f32 %v308, %v630
      %v764 = vadd.f32 %v309, %v632
      %v765 = vadd.f32 %v310, %v634
      %v766 = vadd.f32 %v311, %v638
      %v767 = vadd.f32 %v312, %v640
      %v768 = vadd.f32 %v313, %v642
      %v769 = vadd.f32 %v314, %v644
      %v770 = vadd.f32 %v315, %v648
      %v771 = vadd.f32 %v316, %v650
      %v772 = vadd.f32 %v317, %v652
      %v773 = vadd.f32 %v318, %v654
      %v774 = vadd.f32 %v319, %v658
      %v775 = vadd.f32 %v320, %v660
      %v776 = vadd.f32 %v321, %v662
      %v777 = vadd.f32 %v322, %v664
      %v778 = vadd.f32 %v323, %v668
      %v779 = vadd.f32 %v324, %v670
      %v780 = vadd.f32 %v325, %v672
      %v781 = vadd.f32 %v326, %v674
      %v782 = vadd.f32 %v327, %v678
      %v783 = vadd.f32 %v328, %v680
      %v784 = vadd.f32 %v329, %v682
      %v785 = vadd.f32 %v330, %v684
      %v786 = vadd.f32 %v331, %v688
      %v787 = vadd.f32 %v332, %v690
      %v788 = vadd.f32 %v333, %v692
      %v789 = vadd.f32 %v334, %v694
      %v790 = vadd.f32 %v335, %v698
      %v791 = vadd.f32 %v336, %v700
      %v792 = vadd.f32 %v337, %v702
      %v793 = vadd.f32 %v338, %v704
      %v794 = vadd.f32 %v339, %v708
      %v795 = vadd.f32 %v340, %v710
      %v796 = vadd.f32 %v341, %v712
      %v797 = vadd.f32 %v342, %v714
      %v798 = vadd.f32 %v343, %v718
      %v799 = vadd.f32 %v344, %v720
      %v800 = vadd.f32 %v345, %v722
      %v801 = vadd.f32 %v346, %v724
      %v802 = vadd.f32 %v347, %v728
      %v803 = vadd.f32 %v348, %v730
      %v804 = vadd.f32 %v349, %v732
      %v805 = vadd.f32 %v350, %v734
      %v806 = vadd.f32 %v351, %v738
      %v807 = vadd.f32 %v352, %v740
      %v808 = vadd.f32 %v353, %v742
      %v809 = vadd.f32 %v354, %v744
      %810 = vst [vmem:[#allocation2] sm:$0xff] %v746
      %811 = vst [vmem:[#allocation2 + $0x8] sm:$0xff] %v747
      %812 = vst [vmem:[#allocation2 + $0x10] sm:$0xff] %v748
      %813 = vst [vmem:[#allocation2 + $0x18] sm:$0xff] %v749
      %814 = vst [vmem:[#allocation2 + $0x20] sm:$0xff] %v750
      %815 = vst [vmem:[#allocation2 + $0x28] sm:$0xff] %v751
      %816 = vst [vmem:[#allocation2 + $0x30] sm:$0xff] %v752
      %817 = vst [vmem:[#allocation2 + $0x38] sm:$0xff] %v753
      %818 = vst [vmem:[#allocation2 + $0x40] sm:$0xff] %v754
      %819 = vst [vmem:[#allocation2 + $0x48] sm:$0xff] %v755
      %820 = vst [vmem:[#allocation2 + $0x50] sm:$0xff] %v756
      %821 = vst [vmem:[#allocation2 + $0x58] sm:$0xff] %v757
      %822 = vst [vmem:[#allocation2 + $0x60] sm:$0xff] %v758
      %823 = vst [vmem:[#allocation2 + $0x68] sm:$0xff] %v759
      %824 = vst [vmem:[#allocation2 + $0x70] sm:$0xff] %v760
      %825 = vst [vmem:[#allocation2 + $0x78] sm:$0xff] %v761
      %826 = vst [vmem:[#allocation2 + $0x80] sm:$0xff] %v762
      %827 = vst [vmem:[#allocation2 + $0x88] sm:$0xff] %v763
      %828 = vst [vmem:[#allocation2 + $0x90] sm:$0xff] %v764
      %829 = vst [vmem:[#allocation2 + $0x98] sm:$0xff] %v765
      %830 = vst [vmem:[#allocation2 + $0xa0] sm:$0xff] %v766
      %831 = vst [vmem:[#allocation2 + $0xa8] sm:$0xff] %v767
      %832 = vst [vmem:[#allocation2 + $0xb0] sm:$0xff] %v768
      %833 = vst [vmem:[#allocation2 + $0xb8] sm:$0xff] %v769
      %834 = vst [vmem:[#allocation2 + $0xc0] sm:$0xff] %v770
      %835 = vst [vmem:[#allocation2 + $0xc8] sm:$0xff] %v771
      %836 = vst [vmem:[#allocation2 + $0xd0] sm:$0xff] %v772
      %837 = vst [vmem:[#allocation2 + $0xd8] sm:$0xff] %v773
      %838 = vst [vmem:[#allocation2 + $0xe0] sm:$0xff] %v774
      %839 = vst [vmem:[#allocation2 + $0xe8] sm:$0xff] %v775
      %840 = vst [vmem:[#allocation2 + $0xf0] sm:$0xff] %v776
      %841 = vst [vmem:[#allocation2 + $0xf8] sm:$0xff] %v777
      %842 = vst [vmem:[#allocation2 + $0x100] sm:$0xff] %v778
      %843 = vst [vmem:[#allocation2 + $0x108] sm:$0xff] %v779
      %844 = vst [vmem:[#allocation2 + $0x110] sm:$0xff] %v780
      %845 = vst [vmem:[#allocation2 + $0x118] sm:$0xff] %v781
      %846 = vst [vmem:[#allocation2 + $0x120] sm:$0xff] %v782
      %847 = vst [vmem:[#allocation2 + $0x128] sm:$0xff] %v783
      %848 = vst [vmem:[#allocation2 + $0x130] sm:$0xff] %v784
      %849 = vst [vmem:[#allocation2 + $0x138] sm:$0xff] %v785
      %850 = vst [vmem:[#allocation2 + $0x140] sm:$0xff] %v786
      %851 = vst [vmem:[#allocation2 + $0x148] sm:$0xff] %v787
      %852 = vst [vmem:[#allocation2 + $0x150] sm:$0xff] %v788
      %853 = vst [vmem:[#allocation2 + $0x158] sm:$0xff] %v789
      %854 = vst [vmem:[#allocation2 + $0x160] sm:$0xff] %v790
      %855 = vst [vmem:[#allocation2 + $0x168] sm:$0xff] %v791
      %856 = vst [vmem:[#allocation2 + $0x170] sm:$0xff] %v792
      %857 = vst [vmem:[#allocation2 + $0x178] sm:$0xff] %v793
      %858 = vst [vmem:[#allocation2 + $0x180] sm:$0xff] %v794
      %859 = vst [vmem:[#allocation2 + $0x188] sm:$0xff] %v795
      %860 = vst [vmem:[#allocation2 + $0x190] sm:$0xff] %v796
      %861 = vst [vmem:[#allocation2 + $0x198] sm:$0xff] %v797
      %862 = vst [vmem:[#allocation2 + $0x1a0] sm:$0xff] %v798
      %863 = vst [vmem:[#allocation2 + $0x1a8] sm:$0xff] %v799
      %864 = vst [vmem:[#allocation2 + $0x1b0] sm:$0xff] %v800
      %865 = vst [vmem:[#allocation2 + $0x1b8] sm:$0xff] %v801
      %866 = vst [vmem:[#allocation2 + $0x1c0] sm:$0xff] %v802
      %867 = vst [vmem:[#allocation2 + $0x1c8] sm:$0xff] %v803
      %868 = vst [vmem:[#allocation2 + $0x1d0] sm:$0xff] %v804
      %869 = vst [vmem:[#allocation2 + $0x1d8] sm:$0xff] %v805
      %870 = vst [vmem:[#allocation2 + $0x1e0] sm:$0xff] %v806
      %871 = vst [vmem:[#allocation2 + $0x1e8] sm:$0xff] %v807
      %872 = vst [vmem:[#allocation2 + $0x1f0] sm:$0xff] %v808
      %873 = vst [vmem:[#allocation2 + $0x1f8] sm:$0xff] %v809
      // Predicated region
      $region37: #{mfm_group_forward.3} parent=31 // pred_check
        %p874 = pneg %p223
      $region38: #{mfm_group_forward.3} parent=31 // pred_check_branch
        %876 = sbr.rel (%p874) target = $region40
      $region39: #{mfm_group_forward.3} parent=31 // pred_region
        %v877 = vld [vmem:[#allocation2] sm:$0xff]
        %v878 = vld [vmem:[#allocation2 + $0x8] sm:$0xff]
        %v879 = vld [vmem:[#allocation2 + $0x10] sm:$0xff]
        %v880 = vld [vmem:[#allocation2 + $0x18] sm:$0xff]
        %v881 = vld [vmem:[#allocation2 + $0x20] sm:$0xff]
        %v882 = vld [vmem:[#allocation2 + $0x28] sm:$0xff]
        %v883 = vld [vmem:[#allocation2 + $0x30] sm:$0xff]
        %v884 = vld [vmem:[#allocation2 + $0x38] sm:$0xff]
        %v885 = vld [vmem:[#allocation2 + $0x40] sm:$0xff]
        %v886 = vld [vmem:[#allocation2 + $0x48] sm:$0xff]
        %v887 = vld [vmem:[#allocation2 + $0x50] sm:$0xff]
        %v888 = vld [vmem:[#allocation2 + $0x58] sm:$0xff]
        %v889 = vld [vmem:[#allocation2 + $0x60] sm:$0xff]
        %v890 = vld [vmem:[#allocation2 + $0x68] sm:$0xff]
        %v891 = vld [vmem:[#allocation2 + $0x70] sm:$0xff]
        %v892 = vld [vmem:[#allocation2 + $0x78] sm:$0xff]
        %v893 = vld [vmem:[#allocation2 + $0x80] sm:$0xff]
        %v894 = vld [vmem:[#allocation2 + $0x88] sm:$0xff]
        %v895 = vld [vmem:[#allocation2 + $0x90] sm:$0xff]
        %v896 = vld [vmem:[#allocation2 + $0x98] sm:$0xff]
        %v897 = vld [vmem:[#allocation2 + $0xa0] sm:$0xff]
        %v898 = vld [vmem:[#allocation2 + $0xa8] sm:$0xff]
        %v899 = vld [vmem:[#allocation2 + $0xb0] sm:$0xff]
        %v900 = vld [vmem:[#allocation2 + $0xb8] sm:$0xff]
        %v901 = vld [vmem:[#allocation2 + $0xc0] sm:$0xff]
        %v902 = vld [vmem:[#allocation2 + $0xc8] sm:$0xff]
        %v903 = vld [vmem:[#allocation2 + $0xd0] sm:$0xff]
        %v904 = vld [vmem:[#allocation2 + $0xd8] sm:$0xff]
        %v905 = vld [vmem:[#allocation2 + $0xe0] sm:$0xff]
        %v906 = vld [vmem:[#allocation2 + $0xe8] sm:$0xff]
        %v907 = vld [vmem:[#allocation2 + $0xf0] sm:$0xff]
        %v908 = vld [vmem:[#allocation2 + $0xf8] sm:$0xff]
        %v909 = vld [vmem:[#allocation2 + $0x100] sm:$0xff]
        %v910 = vld [vmem:[#allocation2 + $0x108] sm:$0xff]
        %v911 = vld [vmem:[#allocation2 + $0x110] sm:$0xff]
        %v912 = vld [vmem:[#allocation2 + $0x118] sm:$0xff]
        %v913 = vld [vmem:[#allocation2 + $0x120] sm:$0xff]
        %v914 = vld [vmem:[#allocation2 + $0x128] sm:$0xff]
        %v915 = vld [vmem:[#allocation2 + $0x130] sm:$0xff]
        %v916 = vld [vmem:[#allocation2 + $0x138] sm:$0xff]
        %v917 = vld [vmem:[#allocation2 + $0x140] sm:$0xff]
        %v918 = vld [vmem:[#allocation2 + $0x148] sm:$0xff]
        %v919 = vld [vmem:[#allocation2 + $0x150] sm:$0xff]
        %v920 = vld [vmem:[#allocation2 + $0x158] sm:$0xff]
        %v921 = vld [vmem:[#allocation2 + $0x160] sm:$0xff]
        %v922 = vld [vmem:[#allocation2 + $0x168] sm:$0xff]
        %v923 = vld [vmem:[#allocation2 + $0x170] sm:$0xff]
        %v924 = vld [vmem:[#allocation2 + $0x178] sm:$0xff]
        %v925 = vld [vmem:[#allocation2 + $0x180] sm:$0xff]
        %v926 = vld [vmem:[#allocation2 + $0x188] sm:$0xff]
        %v927 = vld [vmem:[#allocation2 + $0x190] sm:$0xff]
        %v928 = vld [vmem:[#allocation2 + $0x198] sm:$0xff]
        %v929 = vld [vmem:[#allocation2 + $0x1a0] sm:$0xff]
        %v930 = vld [vmem:[#allocation2 + $0x1a8] sm:$0xff]
        %v931 = vld [vmem:[#allocation2 + $0x1b0] sm:$0xff]
        %v932 = vld [vmem:[#allocation2 + $0x1b8] sm:$0xff]
        %v933 = vld [vmem:[#allocation2 + $0x1c0] sm:$0xff]
        %v934 = vld [vmem:[#allocation2 + $0x1c8] sm:$0xff]
        %v935 = vld [vmem:[#allocation2 + $0x1d0] sm:$0xff]
        %v936 = vld [vmem:[#allocation2 + $0x1d8] sm:$0xff]
        %v937 = vld [vmem:[#allocation2 + $0x1e0] sm:$0xff]
        %v938 = vld [vmem:[#allocation2 + $0x1e8] sm:$0xff]
        %v939 = vld [vmem:[#allocation2 + $0x1f0] sm:$0xff]
        %v940 = vld [vmem:[#allocation2 + $0x1f8] sm:$0xff]
        %v941 = vld [vmem:[%s2] sm:$0x3]
        %v943 = vlaneseq
        %v944 = vshrl.u32 %v943, 7
        %v945 = vsub.s32 0, %v944
        %v946 = vrot.slane %v941, %v945
        %v947 = vlaneseq
        %v948 = vshrl.u32 %v947, 7
        %v949 = vsub.s32 1, %v948
        %v950 = vrot.slane %v941, %v949
        %v953 = vadd.f32 %v877, %v946
        %v954 = vadd.f32 %v878, %v950
        %v955 = vadd.f32 %v879, %v946
        %v956 = vadd.f32 %v880, %v950
        %v957 = vadd.f32 %v881, %v946
        %v958 = vadd.f32 %v882, %v950
        %v959 = vadd.f32 %v883, %v946
        %v960 = vadd.f32 %v884, %v950
        %v961 = vadd.f32 %v885, %v946
        %v962 = vadd.f32 %v886, %v950
        %v963 = vadd.f32 %v887, %v946
        %v964 = vadd.f32 %v888, %v950
        %v965 = vadd.f32 %v889, %v946
        %v966 = vadd.f32 %v890, %v950
        %v967 = vadd.f32 %v891, %v946
        %v968 = vadd.f32 %v892, %v950
        %v969 = vadd.f32 %v893, %v946
        %v970 = vadd.f32 %v894, %v950
        %v971 = vadd.f32 %v895, %v946
        %v972 = vadd.f32 %v896, %v950
        %v973 = vadd.f32 %v897, %v946
        %v974 = vadd.f32 %v898, %v950
        %v975 = vadd.f32 %v899, %v946
        %v976 = vadd.f32 %v900, %v950
        %v977 = vadd.f32 %v901, %v946
        %v978 = vadd.f32 %v902, %v950
        %v979 = vadd.f32 %v903, %v946
        %v980 = vadd.f32 %v904, %v950
        %v981 = vadd.f32 %v905, %v946
        %v982 = vadd.f32 %v906, %v950
        %v983 = vadd.f32 %v907, %v946
        %v984 = vadd.f32 %v908, %v950
        %v985 = vadd.f32 %v909, %v946
        %v986 = vadd.f32 %v910, %v950
        %v987 = vadd.f32 %v911, %v946
        %v988 = vadd.f32 %v912, %v950
        %v989 = vadd.f32 %v913, %v946
        %v990 = vadd.f32 %v914, %v950
        %v991 = vadd.f32 %v915, %v946
        %v992 = vadd.f32 %v916, %v950
        %v993 = vadd.f32 %v917, %v946
        %v994 = vadd.f32 %v918, %v950
        %v995 = vadd.f32 %v919, %v946
        %v996 = vadd.f32 %v920, %v950
        %v997 = vadd.f32 %v921, %v946
        %v998 = vadd.f32 %v922, %v950
        %v999 = vadd.f32 %v923, %v946
        %v1000 = vadd.f32 %v924, %v950
        %v1001 = vadd.f32 %v925, %v946
        %v1002 = vadd.f32 %v926, %v950
        %v1003 = vadd.f32 %v927, %v946
        %v1004 = vadd.f32 %v928, %v950
        %v1005 = vadd.f32 %v929, %v946
        %v1006 = vadd.f32 %v930, %v950
        %v1007 = vadd.f32 %v931, %v946
        %v1008 = vadd.f32 %v932, %v950
        %v1009 = vadd.f32 %v933, %v946
        %v1010 = vadd.f32 %v934, %v950
        %v1011 = vadd.f32 %v935, %v946
        %v1012 = vadd.f32 %v936, %v950
        %v1013 = vadd.f32 %v937, %v946
        %v1014 = vadd.f32 %v938, %v950
        %v1015 = vadd.f32 %v939, %v946
        %v1016 = vadd.f32 %v940, %v950
        %v1017 = vmax.f32 %v953, %v954
        %v1018 = vmax.f32 %v955, %v956
        %v1019 = vmax.f32 %v957, %v958
        %v1020 = vmax.f32 %v959, %v960
        %v1021 = vmax.f32 %v961, %v962
        %v1022 = vmax.f32 %v963, %v964
        %v1023 = vmax.f32 %v965, %v966
        %v1024 = vmax.f32 %v967, %v968
        %v1025 = vmax.f32 %v969, %v970
        %v1026 = vmax.f32 %v971, %v972
        %v1027 = vmax.f32 %v973, %v974
        %v1028 = vmax.f32 %v975, %v976
        %v1029 = vmax.f32 %v977, %v978
        %v1030 = vmax.f32 %v979, %v980
        %v1031 = vmax.f32 %v981, %v982
        %v1032 = vmax.f32 %v983, %v984
        %v1033 = vmax.f32 %v985, %v986
        %v1034 = vmax.f32 %v987, %v988
        %v1035 = vmax.f32 %v989, %v990
        %v1036 = vmax.f32 %v991, %v992
        %v1037 = vmax.f32 %v993, %v994
        %v1038 = vmax.f32 %v995, %v996
        %v1039 = vmax.f32 %v997, %v998
        %v1040 = vmax.f32 %v999, %v1000
        %v1041 = vmax.f32 %v1001, %v1002
        %v1042 = vmax.f32 %v1003, %v1004
        %v1043 = vmax.f32 %v1005, %v1006
        %v1044 = vmax.f32 %v1007, %v1008
        %v1045 = vmax.f32 %v1009, %v1010
        %v1046 = vmax.f32 %v1011, %v1012
        %v1047 = vmax.f32 %v1013, %v1014
        %v1048 = vmax.f32 %v1015, %v1016
        %1049 = vst [vmem:[%s220] sm:$0xff] %v1017
        %1050 = vst [vmem:[%s220 + $0x8] sm:$0xff] %v1018
        %1051 = vst [vmem:[%s220 + $0x10] sm:$0xff] %v1019
        %1052 = vst [vmem:[%s220 + $0x18] sm:$0xff] %v1020
        %1053 = vst [vmem:[%s220 + $0x20] sm:$0xff] %v1021
        %1054 = vst [vmem:[%s220 + $0x28] sm:$0xff] %v1022
        %1055 = vst [vmem:[%s220 + $0x30] sm:$0xff] %v1023
        %1056 = vst [vmem:[%s220 + $0x38] sm:$0xff] %v1024
        %1057 = vst [vmem:[%s220 + $0x40] sm:$0xff] %v1025
        %1058 = vst [vmem:[%s220 + $0x48] sm:$0xff] %v1026
        %1059 = vst [vmem:[%s220 + $0x50] sm:$0xff] %v1027
        %1060 = vst [vmem:[%s220 + $0x58] sm:$0xff] %v1028
        %1061 = vst [vmem:[%s220 + $0x60] sm:$0xff] %v1029
        %1062 = vst [vmem:[%s220 + $0x68] sm:$0xff] %v1030
        %1063 = vst [vmem:[%s220 + $0x70] sm:$0xff] %v1031
        %1064 = vst [vmem:[%s220 + $0x78] sm:$0xff] %v1032
        %1065 = vst [vmem:[%s220 + $0x80] sm:$0xff] %v1033
        %1066 = vst [vmem:[%s220 + $0x88] sm:$0xff] %v1034
        %1067 = vst [vmem:[%s220 + $0x90] sm:$0xff] %v1035
        %1068 = vst [vmem:[%s220 + $0x98] sm:$0xff] %v1036
        %1069 = vst [vmem:[%s220 + $0xa0] sm:$0xff] %v1037
        %1070 = vst [vmem:[%s220 + $0xa8] sm:$0xff] %v1038
        %1071 = vst [vmem:[%s220 + $0xb0] sm:$0xff] %v1039
        %1072 = vst [vmem:[%s220 + $0xb8] sm:$0xff] %v1040
        %1073 = vst [vmem:[%s220 + $0xc0] sm:$0xff] %v1041
        %1074 = vst [vmem:[%s220 + $0xc8] sm:$0xff] %v1042
        %1075 = vst [vmem:[%s220 + $0xd0] sm:$0xff] %v1043
        %1076 = vst [vmem:[%s220 + $0xd8] sm:$0xff] %v1044
        %1077 = vst [vmem:[%s220 + $0xe0] sm:$0xff] %v1045
        %1078 = vst [vmem:[%s220 + $0xe8] sm:$0xff] %v1046
        %1079 = vst [vmem:[%s220 + $0xf0] sm:$0xff] %v1047
        %1080 = vst [vmem:[%s220 + $0xf8] sm:$0xff] %v1048
      $region40: #{mfm_group_forward.3} parent=31 // pred_fallthru
        _
      %s1081 = smul.u32 32, %s18
      %p1082 = scmp.lt.s32.totalorder %s1081, 63
      %s1083 = scalar_select %p1082, %s1081, 63
      %s1084 = smul.addr %s1083, 8
      %s1085 = scalar_lea.vmem %s3, %s1084
      // Predicated region
      $region41: #{mfm_group_forward.3} parent=31 // pred_check
        %p1086 = pneg %p119
      $region42: #{mfm_group_forward.3} parent=31 // pred_check_branch
        %1088 = sbr.rel (%p1086) target = $region44
      $region43: #{mfm_group_forward.3} parent=31 // pred_region
        %s1089 = smul.u32 32, %s18
      $region44: #{mfm_group_forward.3} parent=31 // pred_fallthru
        _
    $region32: #{mfm_group_forward.3} parent=5 // pred_fallthru
      _
    %p1090 = scmp.le.s32.totalorder 2, %s9
    // Predicated region
    $region45: #{mfm_group_forward.3} parent=5 // pred_check
      %p1091 = pneg %p1090
    $region46: #{mfm_group_forward.3} parent=5 // pred_check_branch
      %1093 = sbr.rel (%p1091) target = $region48
    $region47: #{mfm_group_forward.3} parent=5 // pred_region
      %s1094 = ssub.s32 %s9, 2
      // Predicated region
      $region49: #{mfm_group_forward.3} parent=47 // pred_check
        %p1095 = pneg %p125
      $region50: #{mfm_group_forward.3} parent=47 // pred_check_branch
        %1097 = sbr.rel (%p1095) target = $region52
      $region51: #{mfm_group_forward.3} parent=47 // pred_region
        %s1098 = smul.u32 32, %s20
        %p1099 = scmp.lt.s32.totalorder %s1098, 63
        %s1100 = scalar_select %p1099, %s1098, 63
        %s1101 = smul.addr %s1100, 8
        %s1102 = scalar_lea.vmem %s3, %s1101
      $region52: #{mfm_group_forward.3} parent=47 // pred_fallthru
        _
    $region48: #{mfm_group_forward.3} parent=5 // pred_fallthru
      _
  $region6: #{mfm_group_forward.3} parent=0 // loop_footer
    %s13 = sadd.s32 1, %s9
  $region7: #{mfm_group_forward.3} parent=0 // loop_footer_branch
    %8 = sbr.rel target = $region3
  $region8: #{mfm_group_forward.3} parent=0 // loop_exit
    _

</llo_original>
